<compile_context>
chip_gen: v7x
topology: tpu7x:2x2x1
jax: 0.10.0
libtpu: 0.0.40
codegen_flags: <defaults>
</compile_context>

<pallas_src>
import math
import functools

import jax
import jax.numpy as jnp
from jax.experimental import pallas as pl
from jax.experimental.pallas import tpu as pltpu


def _gpt_block_kernel(x_ref, mask_ref,
                      ln1_g_ref, ln1_b_ref,
                      w_qkv_ref, b_qkv_ref,
                      wo_ref, bo_ref,
                      ln2_g_ref, ln2_b_ref,
                      w1_ref, b1_ref, w2_ref, b2_ref,
                      o_ref, *, n_head):
    x = x_ref[0]                               # (T, E) f32, current batch element
    T, E = x.shape
    H = n_head
    Dh = E // H
    eps = jnp.float32(1e-5)                    # PyTorch LayerNorm default eps
    bf16, f32 = jnp.bfloat16, jnp.float32

    def layernorm(v, g, b):
        mu = jnp.mean(v, axis=-1, keepdims=True)
        var = jnp.mean(jnp.square(v - mu), axis=-1, keepdims=True)
        return (v - mu) * jax.lax.rsqrt(var + eps) * g + b

    # ---------------- attention branch: attn(ln1(x), ...) with causal mask ----------------
    ln1 = layernorm(x, ln1_g_ref[...], ln1_b_ref[...])                  # (T, E) f32

    # fused full-width QKV projection: (T,E) @ (E,3E)  (1/sqrt(Dh) already folded into Q part)
    qkv = jnp.dot(ln1.astype(bf16), w_qkv_ref[...],
                  preferred_element_type=f32) + b_qkv_ref[...]          # (T, 3E) f32

    # head split: one small bf16 relayout, heads become the leading batch dim
    qkv_h = jnp.transpose(qkv.astype(bf16).reshape(T, 3 * H, Dh), (1, 0, 2))  # (3H, T, Dh) bf16
    q = qkv_h[:H]                                                       # (H, T, Dh)
    k = qkv_h[H:2 * H]
    v = qkv_h[2 * H:]

    # batched QK^T over heads, additive causal bias (precomputed host-side)
    s = jnp.einsum('htd,hsd->hts', q, k, preferred_element_type=f32)    # (H, T, T) f32
    s = s + mask_ref[...]                                               # broadcast (T, T)
    m = jnp.max(s, axis=-1, keepdims=True)
    p = jnp.exp(s - m)                                                  # unnormalized probs
    l = jnp.sum(p, axis=-1, keepdims=True)                              # (H, T, 1) f32

    # PV on unnormalized probs (bf16), normalize the small (H,T,Dh) result afterwards
    attn = jnp.einsum('hts,hsd->htd', p.astype(bf16), v,
                      preferred_element_type=f32)                       # (H, T, Dh) f32
    attn = attn * pl.reciprocal(l, approx=True)

    # merge heads into the contraction dim and run ONE full-width output projection
    attn_m = jnp.transpose(attn.astype(bf16), (1, 0, 2)).reshape(T, E)  # (T, E) bf16
    y = jnp.dot(attn_m, wo_ref[...], preferred_element_type=f32) + bo_ref[...]

    x1 = x + y                                                          # first residual (f32)

    # ---------------- MLP branch: Linear -> exact GELU -> Linear (dropout = identity) -----
    ln2 = layernorm(x1, ln2_g_ref[...], ln2_b_ref[...])
    h1 = jnp.dot(ln2.astype(bf16), w1_ref[...],
                 preferred_element_type=f32) + b1_ref[...]              # (T, 4E) f32
    h1 = 0.5 * h1 * (1.0 + jax.lax.erf(h1 * jnp.float32(1.0 / math.sqrt(2.0))))
    h2 = jnp.dot(h1.astype(bf16), w2_ref[...],
                 preferred_element_type=f32) + b2_ref[...]              # (T, E) f32

    o_ref[0] = x1 + h2                                                  # second residual


def gpt_block(x, params, n_head):
    B, T, E = x.shape
    H = n_head
    Dh = E // H
    f32, bf16 = jnp.float32, jnp.bfloat16

    # ---- host-side (one-time) weight layout prep: PyTorch layout -> MXU-friendly layout ----
    in_w, in_b = params["in_w"], params["in_b"]          # (3E, E), (3E,)
    scale = jnp.float32(1.0 / math.sqrt(Dh))
    # fold the attention scale into the Q rows of the packed projection
    w_qkv_rows = jnp.concatenate(
        [in_w[0:E] * scale, in_w[E:2 * E], in_w[2 * E:3 * E]], axis=0)   # (3E, E)
    b_qkv_rows = jnp.concatenate(
        [in_b[0:E] * scale, in_b[E:2 * E], in_b[2 * E:3 * E]], axis=0)   # (3E,)
    w_qkv = w_qkv_rows.T.astype(bf16)                                    # (E, 3E)
    b_qkv = b_qkv_rows.reshape(1, 3 * E).astype(f32)

    wo = params["out_w"].T.astype(bf16)                                  # (E, E)
    bo = params["out_b"].reshape(1, E).astype(f32)

    w1 = params["fc1_w"].T.astype(bf16)                                  # (E, 4E)
    b1 = params["fc1_b"].reshape(1, 4 * E).astype(f32)
    w2 = params["fc2_w"].T.astype(bf16)                                  # (4E, E)
    b2 = params["fc2_b"].reshape(1, E).astype(f32)

    ln1_g = params["ln1_g"].reshape(1, E).astype(f32)
    ln1_b = params["ln1_b"].reshape(1, E).astype(f32)
    ln2_g = params["ln2_g"].reshape(1, E).astype(f32)
    ln2_b = params["ln2_b"].reshape(1, E).astype(f32)

    # precomputed additive causal bias (diagonal unmasked)
    row = jnp.arange(T, dtype=jnp.int32)[:, None]
    col = jnp.arange(T, dtype=jnp.int32)[None, :]
    mask_bias = jnp.where(col > row, jnp.float32(-1e30), jnp.float32(0.0))   # (T, T)

    weights = [mask_bias,
               ln1_g, ln1_b,
               w_qkv, b_qkv,
               wo, bo,
               ln2_g, ln2_b,
               w1, b1, w2, b2]

    # whole-array, single-buffered VMEM residents (never re-fetched across the grid)
    vmem_resident = pl.BlockSpec(memory_space=pltpu.MemorySpace.VMEM)
    in_specs = [pl.BlockSpec((1, T, E), lambda b: (b, 0, 0))]
    in_specs += [vmem_resident] * len(weights)

    flops = int(24 * B * T * E * E + 4 * B * T * T * E)
    transcendentals = int(B * (H * T * T + 4 * T * E))
    bytes_accessed = int(2 * B * T * E * 4 + 24 * E * E * 2 + T * T * 4)

    return pl.pallas_call(
        functools.partial(_gpt_block_kernel, n_head=n_head),
        out_shape=jax.ShapeDtypeStruct((B, T, E), jnp.float32),
        grid=(B,),
        in_specs=in_specs,
        out_specs=pl.BlockSpec((1, T, E), lambda b: (b, 0, 0)),
        compiler_params=pltpu.CompilerParams(
            dimension_semantics=("parallel",),
            vmem_limit_bytes=32 * 1024 * 1024),
        cost_estimate=pl.CostEstimate(flops=flops,
                                      transcendentals=transcendentals,
                                      bytes_accessed=bytes_accessed),
    )(x, *weights)


def reference(x, p, n_head):
    """Plain-JAX f32 reference matching PyTorch eval-mode semantics."""
    B, T, E = x.shape
    Dh = E // n_head

    def ln(v, g, b):
        mu = v.mean(-1, keepdims=True)
        var = ((v - mu) ** 2).mean(-1, keepdims=True)
        return (v - mu) / jnp.sqrt(var + 1e-5) * g + b

    xl = ln(x, p["ln1_g"], p["ln1_b"])
    qkv = xl @ p["in_w"].T + p["in_b"]
    q, k, v = jnp.split(qkv, 3, axis=-1)
    q = q.reshape(B, T, n_head, Dh).transpose(0, 2, 1, 3) / math.sqrt(Dh)
    k = k.reshape(B, T, n_head, Dh).transpose(0, 2, 1, 3)
    v = v.reshape(B, T, n_head, Dh).transpose(0, 2, 1, 3)
    s = jnp.einsum("bhtd,bhsd->bhts", q, k)
    mask = jnp.triu(jnp.ones((T, T), bool), k=1)
    s = jnp.where(mask, -jnp.inf, s)
    a = jax.nn.softmax(s, axis=-1)
    a = jnp.einsum("bhts,bhsd->bhtd", a, v)
    a = a.transpose(0, 2, 1, 3).reshape(B, T, E)
    y = a @ p["out_w"].T + p["out_b"]
    x1 = x + y
    xl2 = ln(x1, p["ln2_g"], p["ln2_b"])
    h = xl2 @ p["fc1_w"].T + p["fc1_b"]
    h = 0.5 * h * (1.0 + jax.lax.erf(h / math.sqrt(2.0)))
    h = h @ p["fc2_w"].T + p["fc2_b"]
    return x1 + h


def make_params(key, n_embd):
    E = n_embd
    ks = jax.random.split(key, 12)
    s = 0.02
    f32 = jnp.float32
    return {
        "ln1_g": 1.0 + s * jax.random.normal(ks[0], (E,), f32),
        "ln1_b": s * jax.random.normal(ks[1], (E,), f32),
        "in_w":  s * jax.random.normal(ks[2], (3 * E, E), f32),
        "in_b":  s * jax.random.normal(ks[3], (3 * E,), f32),
        "out_w": s * jax.random.normal(ks[4], (E, E), f32),
        "out_b": s * jax.random.normal(ks[5], (E,), f32),
        "ln2_g": 1.0 + s * jax.random.normal(ks[6], (E,), f32),
        "ln2_b": s * jax.random.normal(ks[7], (E,), f32),
        "fc1_w": s * jax.random.normal(ks[8], (4 * E, E), f32),
        "fc1_b": s * jax.random.normal(ks[9], (4 * E,), f32),
        "fc2_w": s * jax.random.normal(ks[10], (E, 4 * E), f32),
        "fc2_b": s * jax.random.normal(ks[11], (E,), f32),
    }


if __name__ == "__main__":
    # small GPTConfig-consistent shapes: n_embd=32, n_head=4, seq=8, batch=2
    B, T, E, H = 2, 8, 32, 4
    key = jax.random.PRNGKey(0)
    kx, kp = jax.random.split(key)
    x = jax.random.normal(kx, (B, T, E), jnp.float32)
    params = make_params(kp, E)

    out = gpt_block(x, params, n_head=H)
    out = jax.block_until_ready(out)

    ref = reference(x, params, n_head=H)
    assert out.shape == (B, T, E)
    # bf16 matmul operands with f32 accumulation -> compare with a bf16-appropriate tolerance
    assert jnp.allclose(out, ref, rtol=2e-2, atol=2e-2), (
        float(jnp.max(jnp.abs(out - ref))))

    print("KERNEL_OK")
</pallas_src>

<mosaic_0001>
module attributes {stable_mosaic.version = 11 : i64} {
  func.func @_gpt_block_kernel(%arg0: i32, %arg1: memref<1x8x32xf32, #tpu.memory_space<vmem>>, %arg2: memref<8x8xf32, #tpu.memory_space<vmem>>, %arg3: memref<1x32xf32, #tpu.memory_space<vmem>>, %arg4: memref<1x32xf32, #tpu.memory_space<vmem>>, %arg5: memref<32x96xbf16, #tpu.memory_space<vmem>>, %arg6: memref<1x96xf32, #tpu.memory_space<vmem>>, %arg7: memref<32x32xbf16, #tpu.memory_space<vmem>>, %arg8: memref<1x32xf32, #tpu.memory_space<vmem>>, %arg9: memref<1x32xf32, #tpu.memory_space<vmem>>, %arg10: memref<1x32xf32, #tpu.memory_space<vmem>>, %arg11: memref<32x128xbf16, #tpu.memory_space<vmem>>, %arg12: memref<1x128xf32, #tpu.memory_space<vmem>>, %arg13: memref<128x32xbf16, #tpu.memory_space<vmem>>, %arg14: memref<1x32xf32, #tpu.memory_space<vmem>>, %arg15: memref<1x8x32xf32, #tpu.memory_space<vmem>>) attributes {dimension_semantics = [#tpu.dimension_semantics<parallel>], iteration_bounds = array<i64: 2>, scalar_prefetch = 0 : i64, scratch_operands = 0 : i64, tpu.core_type = #tpu.core_type<tc>, window_params = [{transform_indices = @transform_0, window_bounds = array<i64: 1, 8, 32>}, {pipeline_mode = #tpu.pipeline_mode<synchronous>, transform_indices = @transform_1, window_bounds = array<i64: 8, 8>}, {pipeline_mode = #tpu.pipeline_mode<synchronous>, transform_indices = @transform_2, window_bounds = array<i64: 1, 32>}, {pipeline_mode = #tpu.pipeline_mode<synchronous>, transform_indices = @transform_3, window_bounds = array<i64: 1, 32>}, {pipeline_mode = #tpu.pipeline_mode<synchronous>, transform_indices = @transform_4, window_bounds = array<i64: 32, 96>}, {pipeline_mode = #tpu.pipeline_mode<synchronous>, transform_indices = @transform_5, window_bounds = array<i64: 1, 96>}, {pipeline_mode = #tpu.pipeline_mode<synchronous>, transform_indices = @transform_6, window_bounds = array<i64: 32, 32>}, {pipeline_mode = #tpu.pipeline_mode<synchronous>, transform_indices = @transform_7, window_bounds = array<i64: 1, 32>}, {pipeline_mode = #tpu.pipeline_mode<synchronous>, transform_indices = @transform_8, window_bounds = array<i64: 1, 32>}, {pipeline_mode = #tpu.pipeline_mode<synchronous>, transform_indices = @transform_9, window_bounds = array<i64: 1, 32>}, {pipeline_mode = #tpu.pipeline_mode<synchronous>, transform_indices = @transform_10, window_bounds = array<i64: 32, 128>}, {pipeline_mode = #tpu.pipeline_mode<synchronous>, transform_indices = @transform_11, window_bounds = array<i64: 1, 128>}, {pipeline_mode = #tpu.pipeline_mode<synchronous>, transform_indices = @transform_12, window_bounds = array<i64: 128, 32>}, {pipeline_mode = #tpu.pipeline_mode<synchronous>, transform_indices = @transform_13, window_bounds = array<i64: 1, 32>}, {transform_indices = @transform_14, window_bounds = array<i64: 1, 8, 32>}]} {
    %c0 = arith.constant 0 : index
    %c0_0 = arith.constant 0 : index
    %c0_1 = arith.constant 0 : index
    %0 = vector.load %arg1[%c0, %c0_0, %c0_1] : memref<1x8x32xf32, #tpu.memory_space<vmem>>, vector<1x8x32xf32>
    %1 = vector.shape_cast %0 : vector<1x8x32xf32> to vector<8x32xf32>
    %c0_2 = arith.constant 0 : index
    %c0_3 = arith.constant 0 : index
    %2 = vector.load %arg3[%c0_2, %c0_3] : memref<1x32xf32, #tpu.memory_space<vmem>>, vector<1x32xf32>
    %c0_4 = arith.constant 0 : index
    %c0_5 = arith.constant 0 : index
    %3 = vector.load %arg4[%c0_4, %c0_5] : memref<1x32xf32, #tpu.memory_space<vmem>>, vector<1x32xf32>
    %cst = arith.constant dense<0.000000e+00> : vector<8xf32>
    %4 = vector.multi_reduction <add>, %1, %cst [1] : vector<8x32xf32> to vector<8xf32>
    %5 = vector.shape_cast %4 : vector<8xf32> to vector<8x1xf32>
    %cst_6 = arith.constant 3.200000e+01 : f32
    %6 = vector.broadcast %cst_6 : f32 to vector<8x1xf32>
    %7 = arith.divf %5, %6 : vector<8x1xf32>
    %8 = vector.broadcast %7 : vector<8x1xf32> to vector<8x32xf32>
    %9 = arith.subf %1, %8 : vector<8x32xf32>
    %10 = arith.mulf %9, %9 : vector<8x32xf32>
    %cst_7 = arith.constant dense<0.000000e+00> : vector<8xf32>
    %11 = vector.multi_reduction <add>, %10, %cst_7 [1] : vector<8x32xf32> to vector<8xf32>
    %12 = vector.shape_cast %11 : vector<8xf32> to vector<8x1xf32>
    %cst_8 = arith.constant 3.200000e+01 : f32
    %13 = vector.broadcast %cst_8 : f32 to vector<8x1xf32>
    %14 = arith.divf %12, %13 : vector<8x1xf32>
    %15 = vector.broadcast %7 : vector<8x1xf32> to vector<8x32xf32>
    %16 = arith.subf %1, %15 : vector<8x32xf32>
    %cst_9 = arith.constant 9.99999974E-6 : f32
    %17 = vector.broadcast %cst_9 : f32 to vector<8x1xf32>
    %18 = arith.addf %14, %17 : vector<8x1xf32>
    %19 = math.rsqrt %18 : vector<8x1xf32>
    %20 = vector.broadcast %19 : vector<8x1xf32> to vector<8x32xf32>
    %21 = arith.mulf %16, %20 : vector<8x32xf32>
    %22 = vector.broadcast %2 : vector<1x32xf32> to vector<8x32xf32>
    %23 = arith.mulf %21, %22 : vector<8x32xf32>
    %24 = vector.broadcast %3 : vector<1x32xf32> to vector<8x32xf32>
    %25 = arith.addf %23, %24 : vector<8x32xf32>
    %26 = arith.truncf %25 : vector<8x32xf32> to vector<8x32xbf16>
    %c0_10 = arith.constant 0 : index
    %c0_11 = arith.constant 0 : index
    %27 = vector.load %arg5[%c0_10, %c0_11] : memref<32x96xbf16, #tpu.memory_space<vmem>>, vector<32x96xbf16>
    %cst_12 = arith.constant dense<0.000000e+00> : vector<8x96xf32>
    %28 = tpu.matmul %26, %27, %cst_12 {dimension_numbers = #tpu.dot_dimension_numbers<[1], [0], [0], [1], [0, 0, 1, 1], [], []>} : vector<8x32xbf16>, vector<32x96xbf16>, vector<8x96xf32> -> vector<8x96xf32>
    %c0_13 = arith.constant 0 : index
    %c0_14 = arith.constant 0 : index
    %29 = vector.load %arg6[%c0_13, %c0_14] : memref<1x96xf32, #tpu.memory_space<vmem>>, vector<1x96xf32>
    %30 = vector.broadcast %29 : vector<1x96xf32> to vector<8x96xf32>
    %31 = arith.addf %28, %30 : vector<8x96xf32>
    %32 = arith.truncf %31 : vector<8x96xf32> to vector<8x96xbf16>
    %33 = vector.shape_cast %32 : vector<8x96xbf16> to vector<8x12x8xbf16>
    %34 = tpu.transpose %33, [1, 0, 2] : vector<8x12x8xbf16> -> vector<12x8x8xbf16>
    %35 = vector.extract_strided_slice %34 {offsets = [0, 0, 0], sizes = [4, 8, 8], strides = [1, 1, 1]} : vector<12x8x8xbf16> to vector<4x8x8xbf16>
    %36 = vector.extract_strided_slice %34 {offsets = [4, 0, 0], sizes = [4, 8, 8], strides = [1, 1, 1]} : vector<12x8x8xbf16> to vector<4x8x8xbf16>
    %37 = vector.extract_strided_slice %34 {offsets = [8, 0, 0], sizes = [4, 8, 8], strides = [1, 1, 1]} : vector<12x8x8xbf16> to vector<4x8x8xbf16>
    "tpu.trace_start"() <{level = 10 : i32, message = "htd,hsd->hts"}> : () -> ()
    %cst_15 = arith.constant dense<0.000000e+00> : vector<4x8x8xf32>
    %38 = tpu.matmul %35, %36, %cst_15 {dimension_numbers = #tpu.dot_dimension_numbers<[2], [2], [1], [1], [0, 0, 0, 1, 1, 1], [0], [0]>} : vector<4x8x8xbf16>, vector<4x8x8xbf16>, vector<4x8x8xf32> -> vector<4x8x8xf32>
    "tpu.trace_stop"() : () -> ()
    %c0_16 = arith.constant 0 : index
    %c0_17 = arith.constant 0 : index
    %39 = vector.load %arg2[%c0_16, %c0_17] : memref<8x8xf32, #tpu.memory_space<vmem>>, vector<8x8xf32>
    %40 = vector.shape_cast %39 : vector<8x8xf32> to vector<1x8x8xf32>
    %41 = vector.broadcast %40 : vector<1x8x8xf32> to vector<4x8x8xf32>
    %42 = arith.addf %38, %41 : vector<4x8x8xf32>
    %cst_18 = arith.constant dense<0xFF800000> : vector<4x8xf32>
    %43 = vector.multi_reduction <maximumf>, %42, %cst_18 [2] : vector<4x8x8xf32> to vector<4x8xf32>
    %44 = vector.shape_cast %43 : vector<4x8xf32> to vector<4x8x1xf32>
    %45 = vector.broadcast %44 : vector<4x8x1xf32> to vector<4x8x8xf32>
    %46 = arith.subf %42, %45 : vector<4x8x8xf32>
    %47 = math.exp %46 : vector<4x8x8xf32>
    %cst_19 = arith.constant dense<0.000000e+00> : vector<4x8xf32>
    %48 = vector.multi_reduction <add>, %47, %cst_19 [2] : vector<4x8x8xf32> to vector<4x8xf32>
    %49 = vector.shape_cast %48 : vector<4x8xf32> to vector<4x8x1xf32>
    %50 = arith.truncf %47 : vector<4x8x8xf32> to vector<4x8x8xbf16>
    "tpu.trace_start"() <{level = 10 : i32, message = "hts,hsd->htd"}> : () -> ()
    %cst_20 = arith.constant dense<0.000000e+00> : vector<4x8x8xf32>
    %51 = tpu.matmul %50, %37, %cst_20 {dimension_numbers = #tpu.dot_dimension_numbers<[2], [1], [1], [2], [0, 0, 0, 1, 1, 2], [0], [0]>} : vector<4x8x8xbf16>, vector<4x8x8xbf16>, vector<4x8x8xf32> -> vector<4x8x8xf32>
    "tpu.trace_stop"() : () -> ()
    %52 = tpu.reciprocal %49 {approx = true} : vector<4x8x1xf32> -> vector<4x8x1xf32>
    %53 = vector.broadcast %52 : vector<4x8x1xf32> to vector<4x8x8xf32>
    %54 = arith.mulf %51, %53 : vector<4x8x8xf32>
    %55 = arith.truncf %54 : vector<4x8x8xf32> to vector<4x8x8xbf16>
    %56 = tpu.transpose %55, [1, 0, 2] : vector<4x8x8xbf16> -> vector<8x4x8xbf16>
    %57 = vector.shape_cast %56 : vector<8x4x8xbf16> to vector<8x32xbf16>
    %c0_21 = arith.constant 0 : index
    %c0_22 = arith.constant 0 : index
    %58 = vector.load %arg7[%c0_21, %c0_22] : memref<32x32xbf16, #tpu.memory_space<vmem>>, vector<32x32xbf16>
    %cst_23 = arith.constant dense<0.000000e+00> : vector<8x32xf32>
    %59 = tpu.matmul %57, %58, %cst_23 {dimension_numbers = #tpu.dot_dimension_numbers<[1], [0], [0], [1], [0, 0, 1, 1], [], []>} : vector<8x32xbf16>, vector<32x32xbf16>, vector<8x32xf32> -> vector<8x32xf32>
    %c0_24 = arith.constant 0 : index
    %c0_25 = arith.constant 0 : index
    %60 = vector.load %arg8[%c0_24, %c0_25] : memref<1x32xf32, #tpu.memory_space<vmem>>, vector<1x32xf32>
    %61 = vector.broadcast %60 : vector<1x32xf32> to vector<8x32xf32>
    %62 = arith.addf %59, %61 : vector<8x32xf32>
    %63 = arith.addf %1, %62 : vector<8x32xf32>
    %c0_26 = arith.constant 0 : index
    %c0_27 = arith.constant 0 : index
    %64 = vector.load %arg9[%c0_26, %c0_27] : memref<1x32xf32, #tpu.memory_space<vmem>>, vector<1x32xf32>
    %c0_28 = arith.constant 0 : index
    %c0_29 = arith.constant 0 : index
    %65 = vector.load %arg10[%c0_28, %c0_29] : memref<1x32xf32, #tpu.memory_space<vmem>>, vector<1x32xf32>
    %cst_30 = arith.constant dense<0.000000e+00> : vector<8xf32>
    %66 = vector.multi_reduction <add>, %63, %cst_30 [1] : vector<8x32xf32> to vector<8xf32>
    %67 = vector.shape_cast %66 : vector<8xf32> to vector<8x1xf32>
    %cst_31 = arith.constant 3.200000e+01 : f32
    %68 = vector.broadcast %cst_31 : f32 to vector<8x1xf32>
    %69 = arith.divf %67, %68 : vector<8x1xf32>
    %70 = vector.broadcast %69 : vector<8x1xf32> to vector<8x32xf32>
    %71 = arith.subf %63, %70 : vector<8x32xf32>
    %72 = arith.mulf %71, %71 : vector<8x32xf32>
    %cst_32 = arith.constant dense<0.000000e+00> : vector<8xf32>
    %73 = vector.multi_reduction <add>, %72, %cst_32 [1] : vector<8x32xf32> to vector<8xf32>
    %74 = vector.shape_cast %73 : vector<8xf32> to vector<8x1xf32>
    %cst_33 = arith.constant 3.200000e+01 : f32
    %75 = vector.broadcast %cst_33 : f32 to vector<8x1xf32>
    %76 = arith.divf %74, %75 : vector<8x1xf32>
    %77 = vector.broadcast %69 : vector<8x1xf32> to vector<8x32xf32>
    %78 = arith.subf %63, %77 : vector<8x32xf32>
    %cst_34 = arith.constant 9.99999974E-6 : f32
    %79 = vector.broadcast %cst_34 : f32 to vector<8x1xf32>
    %80 = arith.addf %76, %79 : vector<8x1xf32>
    %81 = math.rsqrt %80 : vector<8x1xf32>
    %82 = vector.broadcast %81 : vector<8x1xf32> to vector<8x32xf32>
    %83 = arith.mulf %78, %82 : vector<8x32xf32>
    %84 = vector.broadcast %64 : vector<1x32xf32> to vector<8x32xf32>
    %85 = arith.mulf %83, %84 : vector<8x32xf32>
    %86 = vector.broadcast %65 : vector<1x32xf32> to vector<8x32xf32>
    %87 = arith.addf %85, %86 : vector<8x32xf32>
    %88 = arith.truncf %87 : vector<8x32xf32> to vector<8x32xbf16>
    %c0_35 = arith.constant 0 : index
    %c0_36 = arith.constant 0 : index
    %89 = vector.load %arg11[%c0_35, %c0_36] : memref<32x128xbf16, #tpu.memory_space<vmem>>, vector<32x128xbf16>
    %cst_37 = arith.constant dense<0.000000e+00> : vector<8x128xf32>
    %90 = tpu.matmul %88, %89, %cst_37 {dimension_numbers = #tpu.dot_dimension_numbers<[1], [0], [0], [1], [0, 0, 1, 1], [], []>} : vector<8x32xbf16>, vector<32x128xbf16>, vector<8x128xf32> -> vector<8x128xf32>
    %c0_38 = arith.constant 0 : index
    %c0_39 = arith.constant 0 : index
    %91 = vector.load %arg12[%c0_38, %c0_39] : memref<1x128xf32, #tpu.memory_space<vmem>>, vector<1x128xf32>
    %92 = vector.broadcast %91 : vector<1x128xf32> to vector<8x128xf32>
    %93 = arith.addf %90, %92 : vector<8x128xf32>
    %cst_40 = arith.constant 5.000000e-01 : f32
    %94 = vector.broadcast %cst_40 : f32 to vector<8x128xf32>
    %95 = arith.mulf %94, %93 : vector<8x128xf32>
    %cst_41 = arith.constant 0.707106769 : f32
    %96 = vector.broadcast %cst_41 : f32 to vector<8x128xf32>
    %97 = arith.mulf %93, %96 : vector<8x128xf32>
    %98 = math.erf %97 : vector<8x128xf32>
    %cst_42 = arith.constant 1.000000e+00 : f32
    %99 = vector.broadcast %cst_42 : f32 to vector<8x128xf32>
    %100 = arith.addf %99, %98 : vector<8x128xf32>
    %101 = arith.mulf %95, %100 : vector<8x128xf32>
    %102 = arith.truncf %101 : vector<8x128xf32> to vector<8x128xbf16>
    %c0_43 = arith.constant 0 : index
    %c0_44 = arith.constant 0 : index
    %103 = vector.load %arg13[%c0_43, %c0_44] : memref<128x32xbf16, #tpu.memory_space<vmem>>, vector<128x32xbf16>
    %cst_45 = arith.constant dense<0.000000e+00> : vector<8x32xf32>
    %104 = tpu.matmul %102, %103, %cst_45 {dimension_numbers = #tpu.dot_dimension_numbers<[1], [0], [0], [1], [0, 0, 1, 1], [], []>} : vector<8x128xbf16>, vector<128x32xbf16>, vector<8x32xf32> -> vector<8x32xf32>
    %c0_46 = arith.constant 0 : index
    %c0_47 = arith.constant 0 : index
    %105 = vector.load %arg14[%c0_46, %c0_47] : memref<1x32xf32, #tpu.memory_space<vmem>>, vector<1x32xf32>
    %106 = vector.broadcast %105 : vector<1x32xf32> to vector<8x32xf32>
    %107 = arith.addf %104, %106 : vector<8x32xf32>
    %108 = arith.addf %63, %107 : vector<8x32xf32>
    %c0_48 = arith.constant 0 : index
    %c0_49 = arith.constant 0 : index
    %c0_50 = arith.constant 0 : index
    %109 = vector.load %arg15[%c0_48, %c0_49, %c0_50] : memref<1x8x32xf32, #tpu.memory_space<vmem>>, vector<1x8x32xf32>
    %110 = vector.shape_cast %109 : vector<1x8x32xf32> to vector<8x32xf32>
    %111 = vector.shape_cast %108 : vector<8x32xf32> to vector<1x8x32xf32>
    tpu.vector_store %arg15[%c0_48, %c0_49, %c0_50], %111 {strides = array<i32>} : memref<1x8x32xf32, #tpu.memory_space<vmem>>, vector<1x8x32xf32>,
    return
  }
  func.func @transform_0(%arg0: i32) -> (i32, i32, i32) {
    %c0_i32 = arith.constant 0 : i32
    %c0_i32_0 = arith.constant 0 : i32
    %c0_i32_1 = arith.constant 0 : i32
    return %arg0, %c0_i32, %c0_i32_0 : i32, i32, i32
  }
  func.func @transform_1(%arg0: i32) -> (i32, i32) {
    %c0_i32 = arith.constant 0 : i32
    %c0_i32_0 = arith.constant 0 : i32
    %c0_i32_1 = arith.constant 0 : i32
    return %c0_i32, %c0_i32_0 : i32, i32
  }
  func.func @transform_2(%arg0: i32) -> (i32, i32) {
    %c0_i32 = arith.constant 0 : i32
    %c0_i32_0 = arith.constant 0 : i32
    %c0_i32_1 = arith.constant 0 : i32
    return %c0_i32, %c0_i32_0 : i32, i32
  }
  func.func @transform_3(%arg0: i32) -> (i32, i32) {
    %c0_i32 = arith.constant 0 : i32
    %c0_i32_0 = arith.constant 0 : i32
    %c0_i32_1 = arith.constant 0 : i32
    return %c0_i32, %c0_i32_0 : i32, i32
  }
  func.func @transform_4(%arg0: i32) -> (i32, i32) {
    %c0_i32 = arith.constant 0 : i32
    %c0_i32_0 = arith.constant 0 : i32
    %c0_i32_1 = arith.constant 0 : i32
    return %c0_i32, %c0_i32_0 : i32, i32
  }
  func.func @transform_5(%arg0: i32) -> (i32, i32) {
    %c0_i32 = arith.constant 0 : i32
    %c0_i32_0 = arith.constant 0 : i32
    %c0_i32_1 = arith.constant 0 : i32
    return %c0_i32, %c0_i32_0 : i32, i32
  }
  func.func @transform_6(%arg0: i32) -> (i32, i32) {
    %c0_i32 = arith.constant 0 : i32
    %c0_i32_0 = arith.constant 0 : i32
    %c0_i32_1 = arith.constant 0 : i32
    return %c0_i32, %c0_i32_0 : i32, i32
  }
  func.func @transform_7(%arg0: i32) -> (i32, i32) {
    %c0_i32 = arith.constant 0 : i32
    %c0_i32_0 = arith.constant 0 : i32
    %c0_i32_1 = arith.constant 0 : i32
    return %c0_i32, %c0_i32_0 : i32, i32
  }
  func.func @transform_8(%arg0: i32) -> (i32, i32) {
    %c0_i32 = arith.constant 0 : i32
    %c0_i32_0 = arith.constant 0 : i32
    %c0_i32_1 = arith.constant 0 : i32
    return %c0_i32, %c0_i32_0 : i32, i32
  }
  func.func @transform_9(%arg0: i32) -> (i32, i32) {
    %c0_i32 = arith.constant 0 : i32
    %c0_i32_0 = arith.constant 0 : i32
    %c0_i32_1 = arith.constant 0 : i32
    return %c0_i32, %c0_i32_0 : i32, i32
  }
  func.func @transform_10(%arg0: i32) -> (i32, i32) {
    %c0_i32 = arith.constant 0 : i32
    %c0_i32_0 = arith.constant 0 : i32
    %c0_i32_1 = arith.constant 0 : i32
    return %c0_i32, %c0_i32_0 : i32, i32
  }
  func.func @transform_11(%arg0: i32) -> (i32, i32) {
    %c0_i32 = arith.constant 0 : i32
    %c0_i32_0 = arith.constant 0 : i32
    %c0_i32_1 = arith.constant 0 : i32
    return %c0_i32, %c0_i32_0 : i32, i32
  }
  func.func @transform_12(%arg0: i32) -> (i32, i32) {
    %c0_i32 = arith.constant 0 : i32
    %c0_i32_0 = arith.constant 0 : i32
    %c0_i32_1 = arith.constant 0 : i32
    return %c0_i32, %c0_i32_0 : i32, i32
  }
  func.func @transform_13(%arg0: i32) -> (i32, i32) {
    %c0_i32 = arith.constant 0 : i32
    %c0_i32_0 = arith.constant 0 : i32
    %c0_i32_1 = arith.constant 0 : i32
    return %c0_i32, %c0_i32_0 : i32, i32
  }
  func.func @transform_14(%arg0: i32) -> (i32, i32, i32) {
    %c0_i32 = arith.constant 0 : i32
    %c0_i32_0 = arith.constant 0 : i32
    %c0_i32_1 = arith.constant 0 : i32
    return %arg0, %c0_i32, %c0_i32_0 : i32, i32, i32
  }
}

</mosaic_0001>

<llo_original>
// kernel: tpu_custom_call.1
$region0: #{tpu_custom_call.1}
  #allocation0 [shape = 'u32[]', space=smem, size = 0x4, offset = 0x4, fixed_abs, tag = 'smem constant byte address 0x4 - core index']
  #allocation1 [shape = 'u32[144,128]{1,0:T(1,128)}', space=vmem, size = 0x12000, scoped, tag = 'internal scratch']
  %s0 = inlined_call_operand.vmem [shape: f32[2,8,32], index: 0, kind: input, shape index: {}]
  %s1 = inlined_call_operand.vmem [shape: f32[8,8], index: 1, kind: input, shape index: {}]
  %s2 = inlined_call_operand.vmem [shape: f32[1,32], index: 2, kind: input, shape index: {}]
  %s3 = inlined_call_operand.vmem [shape: f32[1,32], index: 3, kind: input, shape index: {}]
  %s4 = inlined_call_operand.vmem [shape: bf16[32,96], index: 4, kind: input, shape index: {}]
  %s5 = inlined_call_operand.vmem [shape: f32[1,96], index: 5, kind: input, shape index: {}]
  %s6 = inlined_call_operand.vmem [shape: bf16[32,32], index: 6, kind: input, shape index: {}]
  %s7 = inlined_call_operand.vmem [shape: f32[1,32], index: 7, kind: input, shape index: {}]
  %s8 = inlined_call_operand.vmem [shape: f32[1,32], index: 8, kind: input, shape index: {}]
  %s9 = inlined_call_operand.vmem [shape: f32[1,32], index: 9, kind: input, shape index: {}]
  %s10 = inlined_call_operand.vmem [shape: bf16[32,128], index: 10, kind: input, shape index: {}]
  %s11 = inlined_call_operand.vmem [shape: f32[1,128], index: 11, kind: input, shape index: {}]
  %s12 = inlined_call_operand.vmem [shape: bf16[128,32], index: 12, kind: input, shape index: {}]
  %s13 = inlined_call_operand.vmem [shape: f32[1,32], index: 13, kind: input, shape index: {}]
  %s14 = inlined_call_operand.hbm [shape: f32[2,8,32], index: 14, kind: output, shape index: {}]
  %s15 = sld [smem:[#allocation0]]
  $region89: #{tpu_custom_call.1} parent=0
    _
  %s17 = ssub.s32 1, %s15
  %s18 = scalar_select 0, %s17, %s15
  $region1: #{tpu_custom_call.1} parent=0
    #allocation2 [shape = 'u8[8192]{0}', space=vmem, size = 0x2000, scoped, tag = 'output window, operand 0']
    #allocation3 [shape = 's32[2]{0}', space=sflag, size = 0x8, scoped, tag = 'scoped memory for tpu_custom_call.1']
    %19 = vsyncpa [#allocation3], 0
    %s20 = scalar_lea.sflag [#allocation3], 1
    %21 = vsyncpa %s20, 0
    loop: start=0, step=1, limit=4
    $region2: #{tpu_custom_call.1} parent=1 // loop_pre_header
      _
    $region3: #{tpu_custom_call.1} parent=1 // loop_header
      %s23 = sphi 0, %s27
      %p24 = scmp.ge.s32.totalorder %s23, 4
      %s33 = sphi 0, %s35
      %s36 = sphi 0, %s33
      %s37 = sphi 0, %s36
      %s53 = sphi 0, %s37
      %s57 = sphi 0, %s57
      %s59 = sphi 0, %s57
      %s60 = sphi 0, %s59
      %s74 = sphi 0, %s60
      %s78 = sphi 0, %s78
      %s80 = sphi 0, %s78
      %s81 = sphi 0, %s80
      %s95 = sphi 0, %s81
      %s99 = sphi 0, %s99
      %s101 = sphi 0, %s99
      %s102 = sphi 0, %s101
      %s116 = sphi 0, %s102
      %s120 = sphi 0, %s120
      %s122 = sphi 0, %s120
      %s123 = sphi 0, %s122
      %s137 = sphi 0, %s123
      %s141 = sphi 0, %s141
      %s143 = sphi 0, %s141
      %s144 = sphi 0, %s143
      %s158 = sphi 0, %s144
      %s162 = sphi 0, %s162
      %s164 = sphi 0, %s162
      %s165 = sphi 0, %s164
      %s179 = sphi 0, %s165
      %s183 = sphi 0, %s183
      %s185 = sphi 0, %s183
      %s186 = sphi 0, %s185
      %s200 = sphi 0, %s186
      %s204 = sphi 0, %s204
      %s206 = sphi 0, %s204
      %s207 = sphi 0, %s206
      %s221 = sphi 0, %s207
      %s225 = sphi 0, %s225
      %s227 = sphi 0, %s225
      %s228 = sphi 0, %s227
      %s242 = sphi 0, %s228
      %s246 = sphi 0, %s246
      %s248 = sphi 0, %s246
      %s249 = sphi 0, %s248
      %s263 = sphi 0, %s249
      %s267 = sphi 0, %s267
      %s269 = sphi 0, %s267
      %s270 = sphi 0, %s269
      %s284 = sphi 0, %s270
      %s288 = sphi 0, %s288
      %s290 = sphi 0, %s288
      %s291 = sphi 0, %s290
      %s305 = sphi 0, %s291
      %s309 = sphi 0, %s309
      %s311 = sphi 0, %s309
      %s312 = sphi 0, %s311
      %s326 = sphi 0, %s312
      %s332 = sphi 0, %s334
      %s335 = sphi 0, %s332
      %s336 = sphi 0, %s335
      %s352 = sphi 0, %s336
    $region4: #{tpu_custom_call.1} parent=1 // loop_header_branch
      %26 = sbr.rel (%p24) target = $region8
    $region5: #{tpu_custom_call.1} parent=1 // loop_body
      %s28 = ssub.s32 %s23, 1
      %s29 = ssub.s32 %s23, 2
      %s30 = sadd.s32 %s23, 1
      %s31 = ssub.s32 %s23, %s30
      %p32 = scmp.eq.s32.totalorder %s31, 0
      %s34 = sadd.s32 %s33, 1
      %s35 = scalar_select %p32, %s33, %s34
      %p38 = pneg %p32
      %p39 = scmp.eq.s32.totalorder %s23, 1
      %p40 = por %p38, %p39
      %p41 = scmp.ne.s32.totalorder %s33, %s36
      %p42 = scmp.eq.s32.totalorder %s23, 0
      %p43 = por %p41, %p42
      %p44 = scmp.ne.s32.totalorder %s33, %s36
      %p45 = scmp.eq.s32.totalorder %s28, 1
      %p46 = por %p44, %p45
      %p47 = scmp.ne.s32.totalorder %s36, %s37
      %p48 = scmp.eq.s32.totalorder %s28, 0
      %p49 = por %p47, %p48
      %p50 = scmp.ne.s32.totalorder %s36, %s37
      %p51 = scmp.eq.s32.totalorder %s29, 1
      %p52 = por %p50, %p51
      %p54 = scmp.ne.s32.totalorder %s37, %s53
      %p55 = scmp.eq.s32.totalorder %s29, 0
      %p56 = por %p54, %p55
      %s58 = sadd.s32 %s57, 1
      %p61 = scmp.eq.s32.totalorder %s23, 1
      %p62 = scmp.ne.s32.totalorder %s57, %s59
      %p63 = scmp.eq.s32.totalorder %s23, 0
      %p64 = por %p62, %p63
      %p65 = scmp.ne.s32.totalorder %s57, %s59
      %p66 = scmp.eq.s32.totalorder %s28, 1
      %p67 = por %p65, %p66
      %p68 = scmp.ne.s32.totalorder %s59, %s60
      %p69 = scmp.eq.s32.totalorder %s28, 0
      %p70 = por %p68, %p69
      %p71 = scmp.ne.s32.totalorder %s59, %s60
      %p72 = scmp.eq.s32.totalorder %s29, 1
      %p73 = por %p71, %p72
      %p75 = scmp.ne.s32.totalorder %s60, %s74
      %p76 = scmp.eq.s32.totalorder %s29, 0
      %p77 = por %p75, %p76
      %s79 = sadd.s32 %s78, 1
      %p82 = scmp.eq.s32.totalorder %s23, 1
      %p83 = scmp.ne.s32.totalorder %s78, %s80
      %p84 = scmp.eq.s32.totalorder %s23, 0
      %p85 = por %p83, %p84
      %p86 = scmp.ne.s32.totalorder %s78, %s80
      %p87 = scmp.eq.s32.totalorder %s28, 1
      %p88 = por %p86, %p87
      %p89 = scmp.ne.s32.totalorder %s80, %s81
      %p90 = scmp.eq.s32.totalorder %s28, 0
      %p91 = por %p89, %p90
      %p92 = scmp.ne.s32.totalorder %s80, %s81
      %p93 = scmp.eq.s32.totalorder %s29, 1
      %p94 = por %p92, %p93
      %p96 = scmp.ne.s32.totalorder %s81, %s95
      %p97 = scmp.eq.s32.totalorder %s29, 0
      %p98 = por %p96, %p97
      %s100 = sadd.s32 %s99, 1
      %p103 = scmp.eq.s32.totalorder %s23, 1
      %p104 = scmp.ne.s32.totalorder %s99, %s101
      %p105 = scmp.eq.s32.totalorder %s23, 0
      %p106 = por %p104, %p105
      %p107 = scmp.ne.s32.totalorder %s99, %s101
      %p108 = scmp.eq.s32.totalorder %s28, 1
      %p109 = por %p107, %p108
      %p110 = scmp.ne.s32.totalorder %s101, %s102
      %p111 = scmp.eq.s32.totalorder %s28, 0
      %p112 = por %p110, %p111
      %p113 = scmp.ne.s32.totalorder %s101, %s102
      %p114 = scmp.eq.s32.totalorder %s29, 1
      %p115 = por %p113, %p114
      %p117 = scmp.ne.s32.totalorder %s102, %s116
      %p118 = scmp.eq.s32.totalorder %s29, 0
      %p119 = por %p117, %p118
      %s121 = sadd.s32 %s120, 1
      %p124 = scmp.eq.s32.totalorder %s23, 1
      %p125 = scmp.ne.s32.totalorder %s120, %s122
      %p126 = scmp.eq.s32.totalorder %s23, 0
      %p127 = por %p125, %p126
      %p128 = scmp.ne.s32.totalorder %s120, %s122
      %p129 = scmp.eq.s32.totalorder %s28, 1
      %p130 = por %p128, %p129
      %p131 = scmp.ne.s32.totalorder %s122, %s123
      %p132 = scmp.eq.s32.totalorder %s28, 0
      %p133 = por %p131, %p132
      %p134 = scmp.ne.s32.totalorder %s122, %s123
      %p135 = scmp.eq.s32.totalorder %s29, 1
      %p136 = por %p134, %p135
      %p138 = scmp.ne.s32.totalorder %s123, %s137
      %p139 = scmp.eq.s32.totalorder %s29, 0
      %p140 = por %p138, %p139
      %s142 = sadd.s32 %s141, 1
      %p145 = scmp.eq.s32.totalorder %s23, 1
      %p146 = scmp.ne.s32.totalorder %s141, %s143
      %p147 = scmp.eq.s32.totalorder %s23, 0
      %p148 = por %p146, %p147
      %p149 = scmp.ne.s32.totalorder %s141, %s143
      %p150 = scmp.eq.s32.totalorder %s28, 1
      %p151 = por %p149, %p150
      %p152 = scmp.ne.s32.totalorder %s143, %s144
      %p153 = scmp.eq.s32.totalorder %s28, 0
      %p154 = por %p152, %p153
      %p155 = scmp.ne.s32.totalorder %s143, %s144
      %p156 = scmp.eq.s32.totalorder %s29, 1
      %p157 = por %p155, %p156
      %p159 = scmp.ne.s32.totalorder %s144, %s158
      %p160 = scmp.eq.s32.totalorder %s29, 0
      %p161 = por %p159, %p160
      %s163 = sadd.s32 %s162, 1
      %p166 = scmp.eq.s32.totalorder %s23, 1
      %p167 = scmp.ne.s32.totalorder %s162, %s164
      %p168 = scmp.eq.s32.totalorder %s23, 0
      %p169 = por %p167, %p168
      %p170 = scmp.ne.s32.totalorder %s162, %s164
      %p171 = scmp.eq.s32.totalorder %s28, 1
      %p172 = por %p170, %p171
      %p173 = scmp.ne.s32.totalorder %s164, %s165
      %p174 = scmp.eq.s32.totalorder %s28, 0
      %p175 = por %p173, %p174
      %p176 = scmp.ne.s32.totalorder %s164, %s165
      %p177 = scmp.eq.s32.totalorder %s29, 1
      %p178 = por %p176, %p177
      %p180 = scmp.ne.s32.totalorder %s165, %s179
      %p181 = scmp.eq.s32.totalorder %s29, 0
      %p182 = por %p180, %p181
      %s184 = sadd.s32 %s183, 1
      %p187 = scmp.eq.s32.totalorder %s23, 1
      %p188 = scmp.ne.s32.totalorder %s183, %s185
      %p189 = scmp.eq.s32.totalorder %s23, 0
      %p190 = por %p188, %p189
      %p191 = scmp.ne.s32.totalorder %s183, %s185
      %p192 = scmp.eq.s32.totalorder %s28, 1
      %p193 = por %p191, %p192
      %p194 = scmp.ne.s32.totalorder %s185, %s186
      %p195 = scmp.eq.s32.totalorder %s28, 0
      %p196 = por %p194, %p195
      %p197 = scmp.ne.s32.totalorder %s185, %s186
      %p198 = scmp.eq.s32.totalorder %s29, 1
      %p199 = por %p197, %p198
      %p201 = scmp.ne.s32.totalorder %s186, %s200
      %p202 = scmp.eq.s32.totalorder %s29, 0
      %p203 = por %p201, %p202
      %s205 = sadd.s32 %s204, 1
      %p208 = scmp.eq.s32.totalorder %s23, 1
      %p209 = scmp.ne.s32.totalorder %s204, %s206
      %p210 = scmp.eq.s32.totalorder %s23, 0
      %p211 = por %p209, %p210
      %p212 = scmp.ne.s32.totalorder %s204, %s206
      %p213 = scmp.eq.s32.totalorder %s28, 1
      %p214 = por %p212, %p213
      %p215 = scmp.ne.s32.totalorder %s206, %s207
      %p216 = scmp.eq.s32.totalorder %s28, 0
      %p217 = por %p215, %p216
      %p218 = scmp.ne.s32.totalorder %s206, %s207
      %p219 = scmp.eq.s32.totalorder %s29, 1
      %p220 = por %p218, %p219
      %p222 = scmp.ne.s32.totalorder %s207, %s221
      %p223 = scmp.eq.s32.totalorder %s29, 0
      %p224 = por %p222, %p223
      %s226 = sadd.s32 %s225, 1
      %p229 = scmp.eq.s32.totalorder %s23, 1
      %p230 = scmp.ne.s32.totalorder %s225, %s227
      %p231 = scmp.eq.s32.totalorder %s23, 0
      %p232 = por %p230, %p231
      %p233 = scmp.ne.s32.totalorder %s225, %s227
      %p234 = scmp.eq.s32.totalorder %s28, 1
      %p235 = por %p233, %p234
      %p236 = scmp.ne.s32.totalorder %s227, %s228
      %p237 = scmp.eq.s32.totalorder %s28, 0
      %p238 = por %p236, %p237
      %p239 = scmp.ne.s32.totalorder %s227, %s228
      %p240 = scmp.eq.s32.totalorder %s29, 1
      %p241 = por %p239, %p240
      %p243 = scmp.ne.s32.totalorder %s228, %s242
      %p244 = scmp.eq.s32.totalorder %s29, 0
      %p245 = por %p243, %p244
      %s247 = sadd.s32 %s246, 1
      %p250 = scmp.eq.s32.totalorder %s23, 1
      %p251 = scmp.ne.s32.totalorder %s246, %s248
      %p252 = scmp.eq.s32.totalorder %s23, 0
      %p253 = por %p251, %p252
      %p254 = scmp.ne.s32.totalorder %s246, %s248
      %p255 = scmp.eq.s32.totalorder %s28, 1
      %p256 = por %p254, %p255
      %p257 = scmp.ne.s32.totalorder %s248, %s249
      %p258 = scmp.eq.s32.totalorder %s28, 0
      %p259 = por %p257, %p258
      %p260 = scmp.ne.s32.totalorder %s248, %s249
      %p261 = scmp.eq.s32.totalorder %s29, 1
      %p262 = por %p260, %p261
      %p264 = scmp.ne.s32.totalorder %s249, %s263
      %p265 = scmp.eq.s32.totalorder %s29, 0
      %p266 = por %p264, %p265
      %s268 = sadd.s32 %s267, 1
      %p271 = scmp.eq.s32.totalorder %s23, 1
      %p272 = scmp.ne.s32.totalorder %s267, %s269
      %p273 = scmp.eq.s32.totalorder %s23, 0
      %p274 = por %p272, %p273
      %p275 = scmp.ne.s32.totalorder %s267, %s269
      %p276 = scmp.eq.s32.totalorder %s28, 1
      %p277 = por %p275, %p276
      %p278 = scmp.ne.s32.totalorder %s269, %s270
      %p279 = scmp.eq.s32.totalorder %s28, 0
      %p280 = por %p278, %p279
      %p281 = scmp.ne.s32.totalorder %s269, %s270
      %p282 = scmp.eq.s32.totalorder %s29, 1
      %p283 = por %p281, %p282
      %p285 = scmp.ne.s32.totalorder %s270, %s284
      %p286 = scmp.eq.s32.totalorder %s29, 0
      %p287 = por %p285, %p286
      %s289 = sadd.s32 %s288, 1
      %p292 = scmp.eq.s32.totalorder %s23, 1
      %p293 = scmp.ne.s32.totalorder %s288, %s290
      %p294 = scmp.eq.s32.totalorder %s23, 0
      %p295 = por %p293, %p294
      %p296 = scmp.ne.s32.totalorder %s288, %s290
      %p297 = scmp.eq.s32.totalorder %s28, 1
      %p298 = por %p296, %p297
      %p299 = scmp.ne.s32.totalorder %s290, %s291
      %p300 = scmp.eq.s32.totalorder %s28, 0
      %p301 = por %p299, %p300
      %p302 = scmp.ne.s32.totalorder %s290, %s291
      %p303 = scmp.eq.s32.totalorder %s29, 1
      %p304 = por %p302, %p303
      %p306 = scmp.ne.s32.totalorder %s291, %s305
      %p307 = scmp.eq.s32.totalorder %s29, 0
      %p308 = por %p306, %p307
      %s310 = sadd.s32 %s309, 1
      %p313 = scmp.eq.s32.totalorder %s23, 1
      %p314 = scmp.ne.s32.totalorder %s309, %s311
      %p315 = scmp.eq.s32.totalorder %s23, 0
      %p316 = por %p314, %p315
      %p317 = scmp.ne.s32.totalorder %s309, %s311
      %p318 = scmp.eq.s32.totalorder %s28, 1
      %p319 = por %p317, %p318
      %p320 = scmp.ne.s32.totalorder %s311, %s312
      %p321 = scmp.eq.s32.totalorder %s28, 0
      %p322 = por %p320, %p321
      %p323 = scmp.ne.s32.totalorder %s311, %s312
      %p324 = scmp.eq.s32.totalorder %s29, 1
      %p325 = por %p323, %p324
      %p327 = scmp.ne.s32.totalorder %s312, %s326
      %p328 = scmp.eq.s32.totalorder %s29, 0
      %p329 = por %p327, %p328
      %s330 = ssub.s32 %s23, %s30
      %p331 = scmp.eq.s32.totalorder %s330, 0
      %s333 = sadd.s32 %s332, 1
      %s334 = scalar_select %p331, %s332, %s333
      %p337 = pneg %p331
      %p338 = scmp.eq.s32.totalorder %s23, 1
      %p339 = por %p337, %p338
      %p340 = scmp.ne.s32.totalorder %s332, %s335
      %p341 = scmp.eq.s32.totalorder %s23, 0
      %p342 = por %p340, %p341
      %p343 = scmp.ne.s32.totalorder %s332, %s335
      %p344 = scmp.eq.s32.totalorder %s28, 1
      %p345 = por %p343, %p344
      %p346 = scmp.ne.s32.totalorder %s335, %s336
      %p347 = scmp.eq.s32.totalorder %s28, 0
      %p348 = por %p346, %p347
      %p349 = scmp.ne.s32.totalorder %s335, %s336
      %p350 = scmp.eq.s32.totalorder %s29, 1
      %p351 = por %p349, %p350
      %p353 = scmp.ne.s32.totalorder %s336, %s352
      %p354 = scmp.eq.s32.totalorder %s29, 0
      %p355 = por %p353, %p354
      %p356 = scmp.le.s32.totalorder 1, %s23
      %p357 = scmp.lt.s32.totalorder %s23, 3
      %p358 = pnand %p356, %p357
      %p359 = pneg %p358
      // Predicated region
      $region9: #{tpu_custom_call.1} parent=5 // pred_check
        _
      $region10: #{tpu_custom_call.1} parent=5 // pred_check_branch
        %361 = sbr.rel (%p358) target = $region12
      $region11: #{tpu_custom_call.1} parent=5 // pred_region
        %s362 = ssub.s32 %s23, 1
        // Predicated region
        $region13: #{tpu_custom_call.1} parent=11 // pred_check
          %p363 = pneg %p70
        $region14: #{tpu_custom_call.1} parent=11 // pred_check_branch
          %365 = sbr.rel (%p363) target = $region16
        $region15: #{tpu_custom_call.1} parent=11 // pred_region
          _
        $region16: #{tpu_custom_call.1} parent=11 // pred_fallthru
          _
        // Predicated region
        $region17: #{tpu_custom_call.1} parent=11 // pred_check
          %p366 = pneg %p91
        $region18: #{tpu_custom_call.1} parent=11 // pred_check_branch
          %368 = sbr.rel (%p366) target = $region20
        $region19: #{tpu_custom_call.1} parent=11 // pred_region
          _
        $region20: #{tpu_custom_call.1} parent=11 // pred_fallthru
          _
        // Predicated region
        $region21: #{tpu_custom_call.1} parent=11 // pred_check
          %p369 = pneg %p112
        $region22: #{tpu_custom_call.1} parent=11 // pred_check_branch
          %371 = sbr.rel (%p369) target = $region24
        $region23: #{tpu_custom_call.1} parent=11 // pred_region
          _
        $region24: #{tpu_custom_call.1} parent=11 // pred_fallthru
          _
        // Predicated region
        $region25: #{tpu_custom_call.1} parent=11 // pred_check
          %p372 = pneg %p133
        $region26: #{tpu_custom_call.1} parent=11 // pred_check_branch
          %374 = sbr.rel (%p372) target = $region28
        $region27: #{tpu_custom_call.1} parent=11 // pred_region
          _
        $region28: #{tpu_custom_call.1} parent=11 // pred_fallthru
          _
        // Predicated region
        $region29: #{tpu_custom_call.1} parent=11 // pred_check
          %p375 = pneg %p154
        $region30: #{tpu_custom_call.1} parent=11 // pred_check_branch
          %377 = sbr.rel (%p375) target = $region32
        $region31: #{tpu_custom_call.1} parent=11 // pred_region
          _
        $region32: #{tpu_custom_call.1} parent=11 // pred_fallthru
          _
        // Predicated region
        $region33: #{tpu_custom_call.1} parent=11 // pred_check
          %p378 = pneg %p175
        $region34: #{tpu_custom_call.1} parent=11 // pred_check_branch
          %380 = sbr.rel (%p378) target = $region36
        $region35: #{tpu_custom_call.1} parent=11 // pred_region
          _
        $region36: #{tpu_custom_call.1} parent=11 // pred_fallthru
          _
        // Predicated region
        $region37: #{tpu_custom_call.1} parent=11 // pred_check
          %p381 = pneg %p196
        $region38: #{tpu_custom_call.1} parent=11 // pred_check_branch
          %383 = sbr.rel (%p381) target = $region40
        $region39: #{tpu_custom_call.1} parent=11 // pred_region
          _
        $region40: #{tpu_custom_call.1} parent=11 // pred_fallthru
          _
        // Predicated region
        $region41: #{tpu_custom_call.1} parent=11 // pred_check
          %p384 = pneg %p217
        $region42: #{tpu_custom_call.1} parent=11 // pred_check_branch
          %386 = sbr.rel (%p384) target = $region44
        $region43: #{tpu_custom_call.1} parent=11 // pred_region
          _
        $region44: #{tpu_custom_call.1} parent=11 // pred_fallthru
          _
        // Predicated region
        $region45: #{tpu_custom_call.1} parent=11 // pred_check
          %p387 = pneg %p238
        $region46: #{tpu_custom_call.1} parent=11 // pred_check_branch
          %389 = sbr.rel (%p387) target = $region48
        $region47: #{tpu_custom_call.1} parent=11 // pred_region
          _
        $region48: #{tpu_custom_call.1} parent=11 // pred_fallthru
          _
        // Predicated region
        $region49: #{tpu_custom_call.1} parent=11 // pred_check
          %p390 = pneg %p259
        $region50: #{tpu_custom_call.1} parent=11 // pred_check_branch
          %392 = sbr.rel (%p390) target = $region52
        $region51: #{tpu_custom_call.1} parent=11 // pred_region
          _
        $region52: #{tpu_custom_call.1} parent=11 // pred_fallthru
          _
        // Predicated region
        $region53: #{tpu_custom_call.1} parent=11 // pred_check
          %p393 = pneg %p280
        $region54: #{tpu_custom_call.1} parent=11 // pred_check_branch
          %395 = sbr.rel (%p393) target = $region56
        $region55: #{tpu_custom_call.1} parent=11 // pred_region
          _
        $region56: #{tpu_custom_call.1} parent=11 // pred_fallthru
          _
        // Predicated region
        $region57: #{tpu_custom_call.1} parent=11 // pred_check
          %p396 = pneg %p301
        $region58: #{tpu_custom_call.1} parent=11 // pred_check_branch
          %398 = sbr.rel (%p396) target = $region60
        $region59: #{tpu_custom_call.1} parent=11 // pred_region
          _
        $region60: #{tpu_custom_call.1} parent=11 // pred_fallthru
          _
        // Predicated region
        $region61: #{tpu_custom_call.1} parent=11 // pred_check
          %p399 = pneg %p322
        $region62: #{tpu_custom_call.1} parent=11 // pred_check_branch
          %401 = sbr.rel (%p399) target = $region64
        $region63: #{tpu_custom_call.1} parent=11 // pred_region
          _
        $region64: #{tpu_custom_call.1} parent=11 // pred_fallthru
          _
      $region12: #{tpu_custom_call.1} parent=5 // pred_fallthru
        _
      %p402 = scmp.lt.s32.totalorder %s23, 2
      // Predicated region
      $region65: #{tpu_custom_call.1} parent=5 // pred_check
        %p403 = pneg %p402
      $region66: #{tpu_custom_call.1} parent=5 // pred_check_branch
        %405 = sbr.rel (%p403) target = $region68
      $region67: #{tpu_custom_call.1} parent=5 // pred_region
        // Predicated region
        $region69: #{tpu_custom_call.1} parent=67 // pred_check
          %p406 = pneg %p43
        $region70: #{tpu_custom_call.1} parent=67 // pred_check_branch
          %408 = sbr.rel (%p406) target = $region72
        $region71: #{tpu_custom_call.1} parent=67 // pred_region
          %p409 = scmp.lt.s32.totalorder %s23, 1
          %s410 = scalar_select %p409, %s23, 1
          %s411 = smul.addr %s410, 8
          %s412 = scalar_lea.vmem %s0, %s411
        $region72: #{tpu_custom_call.1} parent=67 // pred_fallthru
          _
      $region68: #{tpu_custom_call.1} parent=5 // pred_fallthru
        _
      %p413 = scmp.le.s32.totalorder 1, %s23
      %p414 = scmp.lt.s32.totalorder %s23, 3
      %p415 = pnand %p413, %p414
      %p416 = pneg %p415
      // Predicated region
      $region73: #{tpu_custom_call.1} parent=5 // pred_check
        _
      $region74: #{tpu_custom_call.1} parent=5 // pred_check_branch
        %418 = sbr.rel (%p415) target = $region76
      $region75: #{tpu_custom_call.1} parent=5 // pred_region
        %s419 = ssub.s32 %s23, 1
        %p420 = scmp.lt.s32.totalorder %s28, 1
        %s421 = scalar_select %p420, %s28, 1
        %s422 = smul.addr %s421, 8
        %s423 = scalar_lea.vmem %s0, %s422
        %p424 = pneg %p49
        %p425 = pneg %p46
        %p426 = pneg %p70
        %p427 = pneg %p67
        %p428 = pneg %p91
        %p429 = pneg %p88
        %p430 = pneg %p112
        %p431 = pneg %p109
        %p432 = pneg %p133
        %p433 = pneg %p130
        %p434 = pneg %p154
        %p435 = pneg %p151
        %p436 = pneg %p175
        %p437 = pneg %p172
        %p438 = pneg %p196
        %p439 = pneg %p193
        %p440 = pneg %p217
        %p441 = pneg %p214
        %p442 = pneg %p238
        %p443 = pneg %p235
        %p444 = pneg %p259
        %p445 = pneg %p256
        %p446 = pneg %p280
        %p447 = pneg %p277
        %p448 = pneg %p301
        %p449 = pneg %p298
        %p450 = pneg %p322
        %p451 = pneg %p319
        %p452 = pneg %p348
        %p453 = pneg %p345
        %s454 = sand.u32 %s335, 1
        %s455 = scalar_lea.sflag [#allocation3], %s454
        %s456 = sand.u32 %s335, 1
        %s457 = smul.addr %s456, 8
        %s458 = scalar_lea.vmem [#allocation2], %s457
        %p459 = scmp.lt.s32.totalorder %s28, 1
        %s460 = scalar_select %p459, %s28, 1
        %s461 = smul.addr %s460, 8
        %s462 = scalar_lea.vmem %s0, %s461
        %v464 = vld [vmem:[%s462] sm:$0xff]
        %v465 = vld [vmem:[%s2] sm:$0x1]
        %v466 = vld [vmem:[%s3] sm:$0x1]
        %vm467 = vcmask 261120
        %v468 = vsel %vm467, %v464, 0.0
        %469 = vadd.xlane.f32.xlu0 %v468
        %v470 = vpop.xlane.xlu0 %469
        %v471 = vrcp.pop 32.0
        %v472 = vmul.f32 %v470, %v471
        %v473 = vsub.f32 %v464, %v472
        %v474 = vmul.f32 %v473, %v473
        %v475 = vsel %vm467, %v474, 0.0
        %476 = vadd.xlane.f32.xlu0 %v475
        %v477 = vpop.xlane.xlu0 %476
        %v478 = vmul.f32 %v477, %v471
        %v479 = vadd.f32 %v478, 1e-05
        %v480 = vrsqrt.pop %v479
        %v481 = vmul.f32 %v473, %v480
        %v483 = vlaneseq
        %v484 = vshrl.u32 %v483, 7
        %v485 = vsub.s32 0, %v484
        %v486 = vrot.slane %v465, %v485
        %v488 = vmul.f32 %v481, %v486
        %v490 = vlaneseq
        %v491 = vshrl.u32 %v490, 7
        %v492 = vsub.s32 0, %v491
        %v493 = vrot.slane %v466, %v492
        %v495 = vadd.f32 %v488, %v493
        %v496 = vpack.c.bf16 %v495, %v495
        %v497 = vld [vmem:[%s4] sm:$0xf]
        %v498 = vld [vmem:[%s4 + $0x4] sm:$0xf]
        %v499 = vld [vmem:[%s4 + $0x8] sm:$0xf]
        %v500 = vld [vmem:[%s4 + $0xc] sm:$0xf]
        %v501 = vld [vmem:[%s5] sm:$0x1]
        %v503 = vlaneseq
        %v504 = vshrl.u32 %v503, 7
        %v505 = vsub.s32 0, %v504
        %v506 = vrot.slane %v501, %v505
        %v512 = vunpack.c.l.b16 %v497
        %v513 = vunpack.c.l.b16 %v498
        %v514 = vunpack.c.l.b16 %v499
        %v515 = vunpack.c.l.b16 %v500
        %v516 = vpack.c.b16 %v513, %v512
        %v517 = vpack.c.b16 %v515, %v514
        %v521 = vsel %vm467, %v496, 0
        %523 = vmatprep.subr.bf16.mxu0 0
        %524 = vmatpush1.bf16.msra.mxu0 %v516
        %525 = vmatprep.subr.bf16.mxu0 0
        %526 = vmatpush1.bf16.msra.mxu0 %v517
        %527 = vmatprep.subr.bf16.mxu0 0
        %528 = vmatpush1.bf16.msra.mxu0 0
        %529 = vmatprep.subr.bf16.mxu0 0
        %530 = vmatpush1.bf16.msra.mxu0 0
        %531 = vmatprep.subr.bf16.mxu0 0
        %532 = vmatpush1.bf16.msra.mxu0 0
        %533 = vmatprep.subr.bf16.mxu0 0
        %534 = vmatpush1.bf16.msra.mxu0 0
        %535 = vmatprep.subr.bf16.mxu0 0
        %536 = vmatpush1.bf16.msra.mxu0 0
        %537 = vmatprep.subr.bf16.mxu0 0
        %538 = vmatpush1.bf16.msra.mxu0 0
        %539 = vmatprep.subr.bf16.mxu0 0
        %540 = vmatpush1.bf16.msra.mxu0 0
        %541 = vmatprep.subr.bf16.mxu0 0
        %542 = vmatpush1.bf16.msra.mxu0 0
        %543 = vmatprep.subr.bf16.mxu0 0
        %544 = vmatpush1.bf16.msra.mxu0 0
        %545 = vmatprep.subr.bf16.mxu0 0
        %546 = vmatpush1.bf16.msra.mxu0 0
        %547 = vmatprep.subr.bf16.mxu0 0
        %548 = vmatpush1.bf16.msra.mxu0 0
        %549 = vmatprep.subr.bf16.mxu0 0
        %550 = vmatpush1.bf16.msra.mxu0 0
        %551 = vmatprep.subr.bf16.mxu0 0
        %552 = vmatpush1.bf16.msra.mxu0 0
        %553 = vmatprep.subr.bf16.mxu0 0
        %554 = vmatpush1.bf16.msra.mxu0 0
        %555 = vmatprep.mubr.bf16.mxu0 0
        %556 = vmatmul.mubr.bf16.gmra.mrb[0].mxu0 %v521
        %v557 = vpop.f32.mrb[0].mxu0
        %v558 = vadd.f32 %v506, %v557
        %v559 = vpop.f32.mrb[0].mxu0
        %v560 = vpop.f32.mrb[0].mxu0
        %v561 = vpop.f32.mrb[0].mxu0
        %562 = vdwg.mxu0
        %v563 = vpack.c.bf16 %v558, %v558
        %565 = vrot.lane.b32.xlu0 %v563, 120
        %v566 = vpop.permute.xlu0 %565
        %568 = vrot.lane.b32.xlu0 %v563, 112
        %v569 = vpop.permute.xlu0 %568
        %571 = vrot.lane.b32.xlu0 %v563, 104
        %v572 = vpop.permute.xlu0 %571
        %574 = vrot.lane.b32.xlu0 %v563, 96
        %v575 = vpop.permute.xlu0 %574
        %577 = vrot.lane.b32.xlu0 %v563, 88
        %v578 = vpop.permute.xlu0 %577
        %580 = vrot.lane.b32.xlu0 %v563, 80
        %v581 = vpop.permute.xlu0 %580
        %583 = vrot.lane.b32.xlu0 %v563, 72
        %v584 = vpop.permute.xlu0 %583
        %586 = vrot.lane.b32.xlu0 %v563, 64
        %v587 = vpop.permute.xlu0 %586
        %588 = vrot.lane.b32.xlu0 %v563, 56
        %v589 = vpop.permute.xlu0 %588
        %590 = vrot.lane.b32.xlu0 %v563, 48
        %v591 = vpop.permute.xlu0 %590
        %592 = vrot.lane.b32.xlu0 %v563, 40
        %v593 = vpop.permute.xlu0 %592
        %v594 = vcombine.low %v563, %v575
        %v596 = vunpack.c.l.s4 1983009808
        %v597 = vunpack.c.0.s8 %v596
        %v598 = vlaneseq
        %v599 = vshrl.u32 %v598, 7
        %v600 = vsub.s32 %v597, %v599
        %v601 = vrot.slane %v594, %v600
        %v602 = vcombine.low %v569, %v581
        %v604 = vunpack.c.l.s4 1983009808
        %v605 = vunpack.c.0.s8 %v604
        %v606 = vlaneseq
        %v607 = vshrl.u32 %v606, 7
        %v608 = vsub.s32 %v605, %v607
        %v609 = vrot.slane %v602, %v608
        %v612 = vunpack.c.l.s4 1983009808
        %v613 = vunpack.c.0.s8 %v612
        %v614 = vlaneseq
        %v615 = vshrl.u32 %v614, 7
        %v616 = vsub.s32 %v613, %v615
        %v617 = vrot.slane %v587, %v616
        %v620 = vunpack.c.l.s4 1983009808
        %v621 = vunpack.c.0.s8 %v620
        %v622 = vlaneseq
        %v623 = vshrl.u32 %v622, 7
        %v624 = vsub.s32 %v621, %v623
        %v625 = vrot.slane %v591, %v624
        %v626 = vcombine.low %v601, %v609
        %v627 = vcombine.high %v601, %v609
        %v629 = vunpack.c.l.s4 1934713408
        %v630 = vunpack.c.0.s8 %v629
        %v631 = vlaneseq
        %v632 = vshrl.u32 %v631, 7
        %v633 = vsub.s32 %v630, %v632
        %v634 = vrot.slane %v626, %v633
        %v636 = vunpack.c.l.s4 1934713408
        %v637 = vunpack.c.0.s8 %v636
        %v638 = vlaneseq
        %v639 = vshrl.u32 %v638, 7
        %v640 = vsub.s32 %v637, %v639
        %v641 = vrot.slane %v627, %v640
        %v642 = vcombine.low %v617, %v625
        %v643 = vcombine.high %v617, %v625
        %v645 = vunpack.c.l.s4 1934713408
        %v646 = vunpack.c.0.s8 %v645
        %v647 = vlaneseq
        %v648 = vshrl.u32 %v647, 7
        %v649 = vsub.s32 %v646, %v648
        %v650 = vrot.slane %v642, %v649
        %v652 = vunpack.c.l.s4 1934713408
        %v653 = vunpack.c.0.s8 %v652
        %v654 = vlaneseq
        %v655 = vshrl.u32 %v654, 7
        %v656 = vsub.s32 %v653, %v655
        %v657 = vrot.slane %v643, %v656
        %v658 = vcombine.low %v634, %v650
        %v659 = vcombine.high %v634, %v650
        %v660 = vcombine.low %v641, %v657
        %v661 = vcombine.high %v641, %v657
        %v662 = vcombine.low %v566, %v578
        %v664 = vunpack.c.l.s4 1983009808
        %v665 = vunpack.c.0.s8 %v664
        %v666 = vlaneseq
        %v667 = vshrl.u32 %v666, 7
        %v668 = vsub.s32 %v665, %v667
        %v669 = vrot.slane %v662, %v668
        %v670 = vcombine.low %v572, %v584
        %v672 = vunpack.c.l.s4 1983009808
        %v673 = vunpack.c.0.s8 %v672
        %v674 = vlaneseq
        %v675 = vshrl.u32 %v674, 7
        %v676 = vsub.s32 %v673, %v675
        %v677 = vrot.slane %v670, %v676
        %v680 = vunpack.c.l.s4 1983009808
        %v681 = vunpack.c.0.s8 %v680
        %v682 = vlaneseq
        %v683 = vshrl.u32 %v682, 7
        %v684 = vsub.s32 %v681, %v683
        %v685 = vrot.slane %v589, %v684
        %v688 = vunpack.c.l.s4 1983009808
        %v689 = vunpack.c.0.s8 %v688
        %v690 = vlaneseq
        %v691 = vshrl.u32 %v690, 7
        %v692 = vsub.s32 %v689, %v691
        %v693 = vrot.slane %v593, %v692
        %v694 = vcombine.low %v669, %v677
        %v695 = vcombine.high %v669, %v677
        %v697 = vunpack.c.l.s4 1934713408
        %v698 = vunpack.c.0.s8 %v697
        %v699 = vlaneseq
        %v700 = vshrl.u32 %v699, 7
        %v701 = vsub.s32 %v698, %v700
        %v702 = vrot.slane %v694, %v701
        %v704 = vunpack.c.l.s4 1934713408
        %v705 = vunpack.c.0.s8 %v704
        %v706 = vlaneseq
        %v707 = vshrl.u32 %v706, 7
        %v708 = vsub.s32 %v705, %v707
        %v709 = vrot.slane %v695, %v708
        %v710 = vcombine.low %v685, %v693
        %v711 = vcombine.high %v685, %v693
        %v713 = vunpack.c.l.s4 1934713408
        %v714 = vunpack.c.0.s8 %v713
        %v715 = vlaneseq
        %v716 = vshrl.u32 %v715, 7
        %v717 = vsub.s32 %v714, %v716
        %v718 = vrot.slane %v710, %v717
        %v720 = vunpack.c.l.s4 1934713408
        %v721 = vunpack.c.0.s8 %v720
        %v722 = vlaneseq
        %v723 = vshrl.u32 %v722, 7
        %v724 = vsub.s32 %v721, %v723
        %v725 = vrot.slane %v711, %v724
        %v726 = vcombine.low %v702, %v718
        %v727 = vcombine.high %v702, %v718
        %v728 = vcombine.low %v709, %v725
        %v729 = vcombine.high %v709, %v725
        %v732 = vpack.i.b16 %v726, %v658
        %v734 = vshrl.u32 %v658, 16
        %v735 = vshrl.u32 %v726, 16
        %v736 = vpack.i.b16 %v735, %v734
        %v740 = vpack.i.b16 %v727, %v659
        %v742 = vshrl.u32 %v659, 16
        %v743 = vshrl.u32 %v727, 16
        %v744 = vpack.i.b16 %v743, %v742
        %v748 = vpack.i.b16 %v728, %v660
        %v750 = vshrl.u32 %v660, 16
        %v751 = vshrl.u32 %v728, 16
        %v752 = vpack.i.b16 %v751, %v750
        %v756 = vpack.i.b16 %v729, %v661
        %v758 = vshrl.u32 %v661, 16
        %v759 = vshrl.u32 %v729, 16
        %v760 = vpack.i.b16 %v759, %v758
        %v762 = vcombine.low %v732, %v748
        %v763 = vcombine.high %v732, %v748
        %v765 = vunpack.c.l.s4 1983009808
        %v766 = vunpack.c.0.s8 %v765
        %v767 = vlaneseq
        %v768 = vshrl.u32 %v767, 7
        %v769 = vsub.s32 %v766, %v768
        %v770 = vrot.slane %v762, %v769
        %v772 = vunpack.c.l.s4 1983009808
        %v773 = vunpack.c.0.s8 %v772
        %v774 = vlaneseq
        %v775 = vshrl.u32 %v774, 7
        %v776 = vsub.s32 %v773, %v775
        %v777 = vrot.slane %v763, %v776
        %v778 = vcombine.low %v740, %v756
        %v779 = vcombine.high %v740, %v756
        %v781 = vunpack.c.l.s4 1983009808
        %v782 = vunpack.c.0.s8 %v781
        %v783 = vlaneseq
        %v784 = vshrl.u32 %v783, 7
        %v785 = vsub.s32 %v782, %v784
        %v786 = vrot.slane %v778, %v785
        %v788 = vunpack.c.l.s4 1983009808
        %v789 = vunpack.c.0.s8 %v788
        %v790 = vlaneseq
        %v791 = vshrl.u32 %v790, 7
        %v792 = vsub.s32 %v789, %v791
        %v793 = vrot.slane %v779, %v792
        %v794 = vcombine.low %v770, %v786
        %v795 = vcombine.high %v770, %v786
        %v797 = vunpack.c.l.s4 1934713408
        %v798 = vunpack.c.0.s8 %v797
        %v799 = vlaneseq
        %v800 = vshrl.u32 %v799, 7
        %v801 = vsub.s32 %v798, %v800
        %v802 = vrot.slane %v794, %v801
        %v804 = vunpack.c.l.s4 1934713408
        %v805 = vunpack.c.0.s8 %v804
        %v806 = vlaneseq
        %v807 = vshrl.u32 %v806, 7
        %v808 = vsub.s32 %v805, %v807
        %v809 = vrot.slane %v795, %v808
        %v810 = vcombine.low %v777, %v793
        %v812 = vunpack.c.l.s4 1934713408
        %v813 = vunpack.c.0.s8 %v812
        %v814 = vlaneseq
        %v815 = vshrl.u32 %v814, 7
        %v816 = vsub.s32 %v813, %v815
        %v817 = vrot.slane %v810, %v816
        %v818 = vcombine.high %v802, 0
        %v819 = vcombine.high %v809, 0
        %v820 = vcombine.high %v817, 0
        %v821 = vcombine.low %v736, %v752
        %v822 = vcombine.high %v736, %v752
        %v824 = vunpack.c.l.s4 1983009808
        %v825 = vunpack.c.0.s8 %v824
        %v826 = vlaneseq
        %v827 = vshrl.u32 %v826, 7
        %v828 = vsub.s32 %v825, %v827
        %v829 = vrot.slane %v821, %v828
        %v831 = vunpack.c.l.s4 1983009808
        %v832 = vunpack.c.0.s8 %v831
        %v833 = vlaneseq
        %v834 = vshrl.u32 %v833, 7
        %v835 = vsub.s32 %v832, %v834
        %v836 = vrot.slane %v822, %v835
        %v837 = vcombine.low %v744, %v760
        %v838 = vcombine.high %v744, %v760
        %v840 = vunpack.c.l.s4 1983009808
        %v841 = vunpack.c.0.s8 %v840
        %v842 = vlaneseq
        %v843 = vshrl.u32 %v842, 7
        %v844 = vsub.s32 %v841, %v843
        %v845 = vrot.slane %v837, %v844
        %v847 = vunpack.c.l.s4 1983009808
        %v848 = vunpack.c.0.s8 %v847
        %v849 = vlaneseq
        %v850 = vshrl.u32 %v849, 7
        %v851 = vsub.s32 %v848, %v850
        %v852 = vrot.slane %v838, %v851
        %v853 = vcombine.low %v829, %v845
        %v854 = vcombine.high %v829, %v845
        %v856 = vunpack.c.l.s4 1934713408
        %v857 = vunpack.c.0.s8 %v856
        %v858 = vlaneseq
        %v859 = vshrl.u32 %v858, 7
        %v860 = vsub.s32 %v857, %v859
        %v861 = vrot.slane %v853, %v860
        %v863 = vunpack.c.l.s4 1934713408
        %v864 = vunpack.c.0.s8 %v863
        %v865 = vlaneseq
        %v866 = vshrl.u32 %v865, 7
        %v867 = vsub.s32 %v864, %v866
        %v868 = vrot.slane %v854, %v867
        %v869 = vcombine.low %v836, %v852
        %v871 = vunpack.c.l.s4 1934713408
        %v872 = vunpack.c.0.s8 %v871
        %v873 = vlaneseq
        %v874 = vshrl.u32 %v873, 7
        %v875 = vsub.s32 %v872, %v874
        %v876 = vrot.slane %v869, %v875
        %v877 = vcombine.high %v861, 0
        %v878 = vcombine.high %v868, 0
        %v879 = vcombine.high %v876, 0
        %v882 = vpack.i.b16 %v861, %v802
        %v883 = vshrl.u32 %v802, 16
        %v884 = vshrl.u32 %v861, 16
        %v885 = vpack.i.b16 %v884, %v883
        %v888 = vpack.i.b16 %v877, %v818
        %v889 = vshrl.u32 %v818, 16
        %v890 = vshrl.u32 %v877, 16
        %v891 = vpack.i.b16 %v890, %v889
        %v894 = vpack.i.b16 %v868, %v809
        %v895 = vshrl.u32 %v809, 16
        %v896 = vshrl.u32 %v868, 16
        %v897 = vpack.i.b16 %v896, %v895
        %v900 = vpack.i.b16 %v878, %v819
        %v901 = vshrl.u32 %v819, 16
        %v902 = vshrl.u32 %v878, 16
        %v903 = vpack.i.b16 %v902, %v901
        %v906 = vpack.i.b16 %v876, %v817
        %v907 = vshrl.u32 %v817, 16
        %v908 = vshrl.u32 %v876, 16
        %v909 = vpack.i.b16 %v908, %v907
        %v912 = vpack.i.b16 %v879, %v820
        %v913 = vshrl.u32 %v820, 16
        %v914 = vshrl.u32 %v879, 16
        %v915 = vpack.i.b16 %v914, %v913
        %v916 = vld [vmem:[%s1] sm:$0xff]
        %vm917 = vcmask 64512
        %v919 = vsel %vm917, %v882, 0
        %v922 = vsel %vm917, %v894, 0
        %924 = vmatprep.subr.bf16.mxu0 0
        %925 = vmatpush1.bf16.xpose.msra.mxu0 %v922
        %926 = vmatprep.subr.bf16.mxu0 0
        %927 = vmatpush1.bf16.xpose.msra.mxu0 0
        %928 = vmatprep.subr.bf16.mxu0 0
        %929 = vmatpush1.bf16.xpose.msra.mxu0 0
        %930 = vmatprep.subr.bf16.mxu0 0
        %931 = vmatpush1.bf16.xpose.msra.mxu0 0
        %932 = vmatprep.subr.bf16.mxu0 0
        %933 = vmatpush1.bf16.xpose.msra.mxu0 0
        %934 = vmatprep.subr.bf16.mxu0 0
        %935 = vmatpush1.bf16.xpose.msra.mxu0 0
        %936 = vmatprep.subr.bf16.mxu0 0
        %937 = vmatpush1.bf16.xpose.msra.mxu0 0
        %938 = vmatprep.subr.bf16.mxu0 0
        %939 = vmatpush1.bf16.xpose.msra.mxu0 0
        %940 = vmatprep.subr.bf16.mxu0 0
        %941 = vmatpush1.bf16.xpose.msra.mxu0 0
        %942 = vmatprep.subr.bf16.mxu0 0
        %943 = vmatpush1.bf16.xpose.msra.mxu0 0
        %944 = vmatprep.subr.bf16.mxu0 0
        %945 = vmatpush1.bf16.xpose.msra.mxu0 0
        %946 = vmatprep.subr.bf16.mxu0 0
        %947 = vmatpush1.bf16.xpose.msra.mxu0 0
        %948 = vmatprep.subr.bf16.mxu0 0
        %949 = vmatpush1.bf16.xpose.msra.mxu0 0
        %950 = vmatprep.subr.bf16.mxu0 0
        %951 = vmatpush1.bf16.xpose.msra.mxu0 0
        %952 = vmatprep.subr.bf16.mxu0 0
        %953 = vmatpush1.bf16.xpose.msra.mxu0 0
        %954 = vmatprep.subr.bf16.mxu0 0
        %955 = vmatpush1.bf16.xpose.msra.mxu0 0
        %956 = vmatprep.mubr.bf16.mxu0 0
        %957 = vmatmul.mubr.bf16.gmra.mrb[0].mxu0 %v919
        %v958 = vpop.f32.mrb[0].mxu0
        %v959 = vadd.f32 %v916, %v958
        %v960 = vpop.f32.mrb[0].mxu0
        %v961 = vpop.f32.mrb[0].mxu0
        %v962 = vpop.f32.mrb[0].mxu0
        %963 = vdwg.mxu0
        %v965 = vsel %vm917, %v885, 0
        %v968 = vsel %vm917, %v897, 0
        %970 = vmatprep.subr.bf16.mxu0 0
        %971 = vmatpush1.bf16.xpose.msra.mxu0 %v968
        %972 = vmatprep.subr.bf16.mxu0 0
        %973 = vmatpush1.bf16.xpose.msra.mxu0 0
        %974 = vmatprep.subr.bf16.mxu0 0
        %975 = vmatpush1.bf16.xpose.msra.mxu0 0
        %976 = vmatprep.subr.bf16.mxu0 0
        %977 = vmatpush1.bf16.xpose.msra.mxu0 0
        %978 = vmatprep.subr.bf16.mxu0 0
        %979 = vmatpush1.bf16.xpose.msra.mxu0 0
        %980 = vmatprep.subr.bf16.mxu0 0
        %981 = vmatpush1.bf16.xpose.msra.mxu0 0
        %982 = vmatprep.subr.bf16.mxu0 0
        %983 = vmatpush1.bf16.xpose.msra.mxu0 0
        %984 = vmatprep.subr.bf16.mxu0 0
        %985 = vmatpush1.bf16.xpose.msra.mxu0 0
        %986 = vmatprep.subr.bf16.mxu0 0
        %987 = vmatpush1.bf16.xpose.msra.mxu0 0
        %988 = vmatprep.subr.bf16.mxu0 0
        %989 = vmatpush1.bf16.xpose.msra.mxu0 0
        %990 = vmatprep.subr.bf16.mxu0 0
        %991 = vmatpush1.bf16.xpose.msra.mxu0 0
        %992 = vmatprep.subr.bf16.mxu0 0
        %993 = vmatpush1.bf16.xpose.msra.mxu0 0
        %994 = vmatprep.subr.bf16.mxu0 0
        %995 = vmatpush1.bf16.xpose.msra.mxu0 0
        %996 = vmatprep.subr.bf16.mxu0 0
        %997 = vmatpush1.bf16.xpose.msra.mxu0 0
        %998 = vmatprep.subr.bf16.mxu0 0
        %999 = vmatpush1.bf16.xpose.msra.mxu0 0
        %1000 = vmatprep.subr.bf16.mxu0 0
        %1001 = vmatpush1.bf16.xpose.msra.mxu0 0
        %1002 = vmatprep.mubr.bf16.mxu0 0
        %1003 = vmatmul.mubr.bf16.gmra.mrb[0].mxu0 %v965
        %v1004 = vpop.f32.mrb[0].mxu0
        %v1005 = vadd.f32 %v916, %v1004
        %v1006 = vpop.f32.mrb[0].mxu0
        %v1007 = vpop.f32.mrb[0].mxu0
        %v1008 = vpop.f32.mrb[0].mxu0
        %1009 = vdwg.mxu0
        %v1011 = vsel %vm917, %v888, 0
        %v1014 = vsel %vm917, %v900, 0
        %1016 = vmatprep.subr.bf16.mxu0 0
        %1017 = vmatpush1.bf16.xpose.msra.mxu0 %v1014
        %1018 = vmatprep.subr.bf16.mxu0 0
        %1019 = vmatpush1.bf16.xpose.msra.mxu0 0
        %1020 = vmatprep.subr.bf16.mxu0 0
        %1021 = vmatpush1.bf16.xpose.msra.mxu0 0
        %1022 = vmatprep.subr.bf16.mxu0 0
        %1023 = vmatpush1.bf16.xpose.msra.mxu0 0
        %1024 = vmatprep.subr.bf16.mxu0 0
        %1025 = vmatpush1.bf16.xpose.msra.mxu0 0
        %1026 = vmatprep.subr.bf16.mxu0 0
        %1027 = vmatpush1.bf16.xpose.msra.mxu0 0
        %1028 = vmatprep.subr.bf16.mxu0 0
        %1029 = vmatpush1.bf16.xpose.msra.mxu0 0
        %1030 = vmatprep.subr.bf16.mxu0 0
        %1031 = vmatpush1.bf16.xpose.msra.mxu0 0
        %1032 = vmatprep.subr.bf16.mxu0 0
        %1033 = vmatpush1.bf16.xpose.msra.mxu0 0
        %1034 = vmatprep.subr.bf16.mxu0 0
        %1035 = vmatpush1.bf16.xpose.msra.mxu0 0
        %1036 = vmatprep.subr.bf16.mxu0 0
        %1037 = vmatpush1.bf16.xpose.msra.mxu0 0
        %1038 = vmatprep.subr.bf16.mxu0 0
        %1039 = vmatpush1.bf16.xpose.msra.mxu0 0
        %1040 = vmatprep.subr.bf16.mxu0 0
        %1041 = vmatpush1.bf16.xpose.msra.mxu0 0
        %1042 = vmatprep.subr.bf16.mxu0 0
        %1043 = vmatpush1.bf16.xpose.msra.mxu0 0
        %1044 = vmatprep.subr.bf16.mxu0 0
        %1045 = vmatpush1.bf16.xpose.msra.mxu0 0
        %1046 = vmatprep.subr.bf16.mxu0 0
        %1047 = vmatpush1.bf16.xpose.msra.mxu0 0
        %1048 = vmatprep.mubr.bf16.mxu0 0
        %1049 = vmatmul.mubr.bf16.gmra.mrb[0].mxu0 %v1011
        %v1050 = vpop.f32.mrb[0].mxu0
        %v1051 = vadd.f32 %v916, %v1050
        %v1052 = vpop.f32.mrb[0].mxu0
        %v1053 = vpop.f32.mrb[0].mxu0
        %v1054 = vpop.f32.mrb[0].mxu0
        %1055 = vdwg.mxu0
        %v1057 = vsel %vm917, %v891, 0
        %v1060 = vsel %vm917, %v903, 0
        %1062 = vmatprep.subr.bf16.mxu0 0
        %1063 = vmatpush1.bf16.xpose.msra.mxu0 %v1060
        %1064 = vmatprep.subr.bf16.mxu0 0
        %1065 = vmatpush1.bf16.xpose.msra.mxu0 0
        %1066 = vmatprep.subr.bf16.mxu0 0
        %1067 = vmatpush1.bf16.xpose.msra.mxu0 0
        %1068 = vmatprep.subr.bf16.mxu0 0
        %1069 = vmatpush1.bf16.xpose.msra.mxu0 0
        %1070 = vmatprep.subr.bf16.mxu0 0
        %1071 = vmatpush1.bf16.xpose.msra.mxu0 0
        %1072 = vmatprep.subr.bf16.mxu0 0
        %1073 = vmatpush1.bf16.xpose.msra.mxu0 0
        %1074 = vmatprep.subr.bf16.mxu0 0
        %1075 = vmatpush1.bf16.xpose.msra.mxu0 0
        %1076 = vmatprep.subr.bf16.mxu0 0
        %1077 = vmatpush1.bf16.xpose.msra.mxu0 0
        %1078 = vmatprep.subr.bf16.mxu0 0
        %1079 = vmatpush1.bf16.xpose.msra.mxu0 0
        %1080 = vmatprep.subr.bf16.mxu0 0
        %1081 = vmatpush1.bf16.xpose.msra.mxu0 0
        %1082 = vmatprep.subr.bf16.mxu0 0
        %1083 = vmatpush1.bf16.xpose.msra.mxu0 0
        %1084 = vmatprep.subr.bf16.mxu0 0
        %1085 = vmatpush1.bf16.xpose.msra.mxu0 0
        %1086 = vmatprep.subr.bf16.mxu0 0
        %1087 = vmatpush1.bf16.xpose.msra.mxu0 0
        %1088 = vmatprep.subr.bf16.mxu0 0
        %1089 = vmatpush1.bf16.xpose.msra.mxu0 0
        %1090 = vmatprep.subr.bf16.mxu0 0
        %1091 = vmatpush1.bf16.xpose.msra.mxu0 0
        %1092 = vmatprep.subr.bf16.mxu0 0
        %1093 = vmatpush1.bf16.xpose.msra.mxu0 0
        %1094 = vmatprep.mubr.bf16.mxu0 0
        %1095 = vmatmul.mubr.bf16.gmra.mrb[0].mxu0 %v1057
        %v1096 = vpop.f32.mrb[0].mxu0
        %v1097 = vadd.f32 %v916, %v1096
        %v1098 = vpop.f32.mrb[0].mxu0
        %v1099 = vpop.f32.mrb[0].mxu0
        %v1100 = vpop.f32.mrb[0].mxu0
        %1101 = vdwg.mxu0
        %v1102 = vsel %vm917, %v959, -inf
        %1103 = vmax.xlane.f32.xlu0 %v1102
        %v1104 = vpop.xlane.xlu0 %1103
        %v1105 = vsel %vm917, %v1005, -inf
        %1106 = vmax.xlane.f32.xlu0 %v1105
        %v1107 = vpop.xlane.xlu0 %1106
        %v1108 = vsel %vm917, %v1051, -inf
        %1109 = vmax.xlane.f32.xlu0 %v1108
        %v1110 = vpop.xlane.xlu0 %1109
        %v1111 = vsel %vm917, %v1097, -inf
        %1112 = vmax.xlane.f32.xlu0 %v1111
        %v1113 = vpop.xlane.xlu0 %1112
        %v1114 = vsub.f32 %v959, %v1104
        %v1115 = vsub.f32 %v1005, %v1107
        %v1116 = vsub.f32 %v1051, %v1110
        %v1117 = vsub.f32 %v1097, %v1113
        %v1118 = vmul.f32 %v1114, 1.442695
        %v1119 = vpow.pop %v1118
        %v1120 = vmul.f32 %v1115, 1.442695
        %v1121 = vpow.pop %v1120
        %v1122 = vmul.f32 %v1116, 1.442695
        %v1123 = vpow.pop %v1122
        %v1124 = vmul.f32 %v1117, 1.442695
        %v1125 = vpow.pop %v1124
        %v1126 = vsel %vm917, %v1119, 0.0
        %1127 = vadd.xlane.f32.xlu0 %v1126
        %v1128 = vpop.xlane.xlu0 %1127
        %v1129 = vsel %vm917, %v1121, 0.0
        %1130 = vadd.xlane.f32.xlu0 %v1129
        %v1131 = vpop.xlane.xlu0 %1130
        %v1132 = vsel %vm917, %v1123, 0.0
        %1133 = vadd.xlane.f32.xlu0 %v1132
        %v1134 = vpop.xlane.xlu0 %1133
        %v1135 = vsel %vm917, %v1125, 0.0
        %1136 = vadd.xlane.f32.xlu0 %v1135
        %v1137 = vpop.xlane.xlu0 %1136
        %v1138 = vpack.c.bf16 %v1119, %v1119
        %v1139 = vpack.c.bf16 %v1121, %v1121
        %v1140 = vpack.c.bf16 %v1123, %v1123
        %v1141 = vpack.c.bf16 %v1125, %v1125
        %v1143 = vsel %vm917, %v1138, 0
        %vm1145 = vcmask 1043456
        %v1147 = vsel %vm1145, %v906, 0
        %1149 = vmatprep.subr.bf16.mxu0 0
        %1150 = vmatpush1.bf16.msra.mxu0 %v1147
        %1151 = vmatprep.subr.bf16.mxu0 0
        %1152 = vmatpush1.bf16.msra.mxu0 0
        %1153 = vmatprep.subr.bf16.mxu0 0
        %1154 = vmatpush1.bf16.msra.mxu0 0
        %1155 = vmatprep.subr.bf16.mxu0 0
        %1156 = vmatpush1.bf16.msra.mxu0 0
        %1157 = vmatprep.subr.bf16.mxu0 0
        %1158 = vmatpush1.bf16.msra.mxu0 0
        %1159 = vmatprep.subr.bf16.mxu0 0
        %1160 = vmatpush1.bf16.msra.mxu0 0
        %1161 = vmatprep.subr.bf16.mxu0 0
        %1162 = vmatpush1.bf16.msra.mxu0 0
        %1163 = vmatprep.subr.bf16.mxu0 0
        %1164 = vmatpush1.bf16.msra.mxu0 0
        %1165 = vmatprep.subr.bf16.mxu0 0
        %1166 = vmatpush1.bf16.msra.mxu0 0
        %1167 = vmatprep.subr.bf16.mxu0 0
        %1168 = vmatpush1.bf16.msra.mxu0 0
        %1169 = vmatprep.subr.bf16.mxu0 0
        %1170 = vmatpush1.bf16.msra.mxu0 0
        %1171 = vmatprep.subr.bf16.mxu0 0
        %1172 = vmatpush1.bf16.msra.mxu0 0
        %1173 = vmatprep.subr.bf16.mxu0 0
        %1174 = vmatpush1.bf16.msra.mxu0 0
        %1175 = vmatprep.subr.bf16.mxu0 0
        %1176 = vmatpush1.bf16.msra.mxu0 0
        %1177 = vmatprep.subr.bf16.mxu0 0
        %1178 = vmatpush1.bf16.msra.mxu0 0
        %1179 = vmatprep.subr.bf16.mxu0 0
        %1180 = vmatpush1.bf16.msra.mxu0 0
        %1181 = vmatprep.mubr.bf16.mxu0 0
        %1182 = vmatmul.mubr.bf16.gmra.mrb[0].mxu0 %v1143
        %v1183 = vpop.f32.mrb[0].mxu0
        %v1184 = vadd.f32 0.0, %v1183
        %v1185 = vpop.f32.mrb[0].mxu0
        %v1186 = vpop.f32.mrb[0].mxu0
        %v1187 = vpop.f32.mrb[0].mxu0
        %1188 = vdwg.mxu0
        %v1190 = vsel %vm917, %v1139, 0
        %v1193 = vsel %vm1145, %v909, 0
        %1195 = vmatprep.subr.bf16.mxu0 0
        %1196 = vmatpush1.bf16.msra.mxu0 %v1193
        %1197 = vmatprep.subr.bf16.mxu0 0
        %1198 = vmatpush1.bf16.msra.mxu0 0
        %1199 = vmatprep.subr.bf16.mxu0 0
        %1200 = vmatpush1.bf16.msra.mxu0 0
        %1201 = vmatprep.subr.bf16.mxu0 0
        %1202 = vmatpush1.bf16.msra.mxu0 0
        %1203 = vmatprep.subr.bf16.mxu0 0
        %1204 = vmatpush1.bf16.msra.mxu0 0
        %1205 = vmatprep.subr.bf16.mxu0 0
        %1206 = vmatpush1.bf16.msra.mxu0 0
        %1207 = vmatprep.subr.bf16.mxu0 0
        %1208 = vmatpush1.bf16.msra.mxu0 0
        %1209 = vmatprep.subr.bf16.mxu0 0
        %1210 = vmatpush1.bf16.msra.mxu0 0
        %1211 = vmatprep.subr.bf16.mxu0 0
        %1212 = vmatpush1.bf16.msra.mxu0 0
        %1213 = vmatprep.subr.bf16.mxu0 0
        %1214 = vmatpush1.bf16.msra.mxu0 0
        %1215 = vmatprep.subr.bf16.mxu0 0
        %1216 = vmatpush1.bf16.msra.mxu0 0
        %1217 = vmatprep.subr.bf16.mxu0 0
        %1218 = vmatpush1.bf16.msra.mxu0 0
        %1219 = vmatprep.subr.bf16.mxu0 0
        %1220 = vmatpush1.bf16.msra.mxu0 0
        %1221 = vmatprep.subr.bf16.mxu0 0
        %1222 = vmatpush1.bf16.msra.mxu0 0
        %1223 = vmatprep.subr.bf16.mxu0 0
        %1224 = vmatpush1.bf16.msra.mxu0 0
        %1225 = vmatprep.subr.bf16.mxu0 0
        %1226 = vmatpush1.bf16.msra.mxu0 0
        %1227 = vmatprep.mubr.bf16.mxu0 0
        %1228 = vmatmul.mubr.bf16.gmra.mrb[0].mxu0 %v1190
        %v1229 = vpop.f32.mrb[0].mxu0
        %v1230 = vadd.f32 0.0, %v1229
        %v1231 = vpop.f32.mrb[0].mxu0
        %v1232 = vpop.f32.mrb[0].mxu0
        %v1233 = vpop.f32.mrb[0].mxu0
        %1234 = vdwg.mxu0
        %v1236 = vsel %vm917, %v1140, 0
        %v1239 = vsel %vm1145, %v912, 0
        %1241 = vmatprep.subr.bf16.mxu0 0
        %1242 = vmatpush1.bf16.msra.mxu0 %v1239
        %1243 = vmatprep.subr.bf16.mxu0 0
        %1244 = vmatpush1.bf16.msra.mxu0 0
        %1245 = vmatprep.subr.bf16.mxu0 0
        %1246 = vmatpush1.bf16.msra.mxu0 0
        %1247 = vmatprep.subr.bf16.mxu0 0
        %1248 = vmatpush1.bf16.msra.mxu0 0
        %1249 = vmatprep.subr.bf16.mxu0 0
        %1250 = vmatpush1.bf16.msra.mxu0 0
        %1251 = vmatprep.subr.bf16.mxu0 0
        %1252 = vmatpush1.bf16.msra.mxu0 0
        %1253 = vmatprep.subr.bf16.mxu0 0
        %1254 = vmatpush1.bf16.msra.mxu0 0
        %1255 = vmatprep.subr.bf16.mxu0 0
        %1256 = vmatpush1.bf16.msra.mxu0 0
        %1257 = vmatprep.subr.bf16.mxu0 0
        %1258 = vmatpush1.bf16.msra.mxu0 0
        %1259 = vmatprep.subr.bf16.mxu0 0
        %1260 = vmatpush1.bf16.msra.mxu0 0
        %1261 = vmatprep.subr.bf16.mxu0 0
        %1262 = vmatpush1.bf16.msra.mxu0 0
        %1263 = vmatprep.subr.bf16.mxu0 0
        %1264 = vmatpush1.bf16.msra.mxu0 0
        %1265 = vmatprep.subr.bf16.mxu0 0
        %1266 = vmatpush1.bf16.msra.mxu0 0
        %1267 = vmatprep.subr.bf16.mxu0 0
        %1268 = vmatpush1.bf16.msra.mxu0 0
        %1269 = vmatprep.subr.bf16.mxu0 0
        %1270 = vmatpush1.bf16.msra.mxu0 0
        %1271 = vmatprep.subr.bf16.mxu0 0
        %1272 = vmatpush1.bf16.msra.mxu0 0
        %1273 = vmatprep.mubr.bf16.mxu0 0
        %1274 = vmatmul.mubr.bf16.gmra.mrb[0].mxu0 %v1236
        %v1275 = vpop.f32.mrb[0].mxu0
        %v1276 = vadd.f32 0.0, %v1275
        %v1277 = vpop.f32.mrb[0].mxu0
        %v1278 = vpop.f32.mrb[0].mxu0
        %v1279 = vpop.f32.mrb[0].mxu0
        %1280 = vdwg.mxu0
        %v1282 = vsel %vm917, %v1141, 0
        %v1285 = vsel %vm1145, %v915, 0
        %1287 = vmatprep.subr.bf16.mxu0 0
        %1288 = vmatpush1.bf16.msra.mxu0 %v1285
        %1289 = vmatprep.subr.bf16.mxu0 0
        %1290 = vmatpush1.bf16.msra.mxu0 0
        %1291 = vmatprep.subr.bf16.mxu0 0
        %1292 = vmatpush1.bf16.msra.mxu0 0
        %1293 = vmatprep.subr.bf16.mxu0 0
        %1294 = vmatpush1.bf16.msra.mxu0 0
        %1295 = vmatprep.subr.bf16.mxu0 0
        %1296 = vmatpush1.bf16.msra.mxu0 0
        %1297 = vmatprep.subr.bf16.mxu0 0
        %1298 = vmatpush1.bf16.msra.mxu0 0
        %1299 = vmatprep.subr.bf16.mxu0 0
        %1300 = vmatpush1.bf16.msra.mxu0 0
        %1301 = vmatprep.subr.bf16.mxu0 0
        %1302 = vmatpush1.bf16.msra.mxu0 0
        %1303 = vmatprep.subr.bf16.mxu0 0
        %1304 = vmatpush1.bf16.msra.mxu0 0
        %1305 = vmatprep.subr.bf16.mxu0 0
        %1306 = vmatpush1.bf16.msra.mxu0 0
        %1307 = vmatprep.subr.bf16.mxu0 0
        %1308 = vmatpush1.bf16.msra.mxu0 0
        %1309 = vmatprep.subr.bf16.mxu0 0
        %1310 = vmatpush1.bf16.msra.mxu0 0
        %1311 = vmatprep.subr.bf16.mxu0 0
        %1312 = vmatpush1.bf16.msra.mxu0 0
        %1313 = vmatprep.subr.bf16.mxu0 0
        %1314 = vmatpush1.bf16.msra.mxu0 0
        %1315 = vmatprep.subr.bf16.mxu0 0
        %1316 = vmatpush1.bf16.msra.mxu0 0
        %1317 = vmatprep.subr.bf16.mxu0 0
        %1318 = vmatpush1.bf16.msra.mxu0 0
        %1319 = vmatprep.mubr.bf16.mxu0 0
        %1320 = vmatmul.mubr.bf16.gmra.mrb[0].mxu0 %v1282
        %v1321 = vpop.f32.mrb[0].mxu0
        %v1322 = vadd.f32 0.0, %v1321
        %v1323 = vpop.f32.mrb[0].mxu0
        %v1324 = vpop.f32.mrb[0].mxu0
        %v1325 = vpop.f32.mrb[0].mxu0
        %1326 = vdwg.mxu0
        %v1327 = vrcp.pop %v1128
        %v1328 = vrcp.pop %v1131
        %v1329 = vrcp.pop %v1134
        %v1330 = vrcp.pop %v1137
        %v1331 = vmul.f32 %v1184, %v1327
        %v1332 = vmul.f32 %v1230, %v1328
        %v1333 = vmul.f32 %v1276, %v1329
        %v1334 = vmul.f32 %v1322, %v1330
        %v1335 = vpack.c.bf16 %v1331, %v1331
        %v1337 = vunpack.c.l.s4 1983009808
        %v1338 = vunpack.c.0.s8 %v1337
        %v1339 = vlaneseq
        %v1340 = vshrl.u32 %v1339, 7
        %v1341 = vsub.s32 %v1338, %v1340
        %v1342 = vrot.slane %v1335, %v1341
        %v1343 = vpack.c.bf16 %v1333, %v1333
        %v1345 = vunpack.c.l.s4 1983009808
        %v1346 = vunpack.c.0.s8 %v1345
        %v1347 = vlaneseq
        %v1348 = vshrl.u32 %v1347, 7
        %v1349 = vsub.s32 %v1346, %v1348
        %v1350 = vrot.slane %v1343, %v1349
        %v1351 = vcombine.low %v1342, %v1350
        %v1352 = vcombine.high %v1342, %v1350
        %v1354 = vunpack.c.l.s4 1934713408
        %v1355 = vunpack.c.0.s8 %v1354
        %v1356 = vlaneseq
        %v1357 = vshrl.u32 %v1356, 7
        %v1358 = vsub.s32 %v1355, %v1357
        %v1359 = vrot.slane %v1351, %v1358
        %v1361 = vunpack.c.l.s4 1934713408
        %v1362 = vunpack.c.0.s8 %v1361
        %v1363 = vlaneseq
        %v1364 = vshrl.u32 %v1363, 7
        %v1365 = vsub.s32 %v1362, %v1364
        %v1366 = vrot.slane %v1352, %v1365
        %v1367 = vcombine.high %v1359, 0
        %v1368 = vcombine.high %v1366, 0
        %v1369 = vpack.c.bf16 %v1332, %v1332
        %v1371 = vunpack.c.l.s4 1983009808
        %v1372 = vunpack.c.0.s8 %v1371
        %v1373 = vlaneseq
        %v1374 = vshrl.u32 %v1373, 7
        %v1375 = vsub.s32 %v1372, %v1374
        %v1376 = vrot.slane %v1369, %v1375
        %v1377 = vpack.c.bf16 %v1334, %v1334
        %v1379 = vunpack.c.l.s4 1983009808
        %v1380 = vunpack.c.0.s8 %v1379
        %v1381 = vlaneseq
        %v1382 = vshrl.u32 %v1381, 7
        %v1383 = vsub.s32 %v1380, %v1382
        %v1384 = vrot.slane %v1377, %v1383
        %v1385 = vcombine.low %v1376, %v1384
        %v1386 = vcombine.high %v1376, %v1384
        %v1388 = vunpack.c.l.s4 1934713408
        %v1389 = vunpack.c.0.s8 %v1388
        %v1390 = vlaneseq
        %v1391 = vshrl.u32 %v1390, 7
        %v1392 = vsub.s32 %v1389, %v1391
        %v1393 = vrot.slane %v1385, %v1392
        %v1395 = vunpack.c.l.s4 1934713408
        %v1396 = vunpack.c.0.s8 %v1395
        %v1397 = vlaneseq
        %v1398 = vshrl.u32 %v1397, 7
        %v1399 = vsub.s32 %v1396, %v1398
        %v1400 = vrot.slane %v1386, %v1399
        %v1401 = vcombine.high %v1393, 0
        %v1402 = vcombine.high %v1400, 0
        %v1405 = vpack.i.b16 %v1393, %v1359
        %v1407 = vshrl.u32 %v1359, 16
        %v1408 = vshrl.u32 %v1393, 16
        %v1409 = vpack.i.b16 %v1408, %v1407
        %v1413 = vpack.i.b16 %v1401, %v1367
        %v1415 = vshrl.u32 %v1367, 16
        %v1416 = vshrl.u32 %v1401, 16
        %v1417 = vpack.i.b16 %v1416, %v1415
        %v1421 = vpack.i.b16 %v1400, %v1366
        %v1423 = vshrl.u32 %v1366, 16
        %v1424 = vshrl.u32 %v1400, 16
        %v1425 = vpack.i.b16 %v1424, %v1423
        %v1429 = vpack.i.b16 %v1402, %v1368
        %v1431 = vshrl.u32 %v1368, 16
        %v1432 = vshrl.u32 %v1402, 16
        %v1433 = vpack.i.b16 %v1432, %v1431
        %v1435 = vcombine.low %v1405, %v1421
        %v1437 = vunpack.c.l.s4 1983009808
        %v1438 = vunpack.c.0.s8 %v1437
        %v1439 = vlaneseq
        %v1440 = vshrl.u32 %v1439, 7
        %v1441 = vsub.s32 %v1438, %v1440
        %v1442 = vrot.slane %v1435, %v1441
        %v1443 = vcombine.low %v1413, %v1429
        %v1445 = vunpack.c.l.s4 1983009808
        %v1446 = vunpack.c.0.s8 %v1445
        %v1447 = vlaneseq
        %v1448 = vshrl.u32 %v1447, 7
        %v1449 = vsub.s32 %v1446, %v1448
        %v1450 = vrot.slane %v1443, %v1449
        %v1451 = vcombine.low %v1442, %v1450
        %v1453 = vunpack.c.l.s4 1934713408
        %v1454 = vunpack.c.0.s8 %v1453
        %v1455 = vlaneseq
        %v1456 = vshrl.u32 %v1455, 7
        %v1457 = vsub.s32 %v1454, %v1456
        %v1458 = vrot.slane %v1451, %v1457
        %v1459 = vcombine.high %v1458, 0
        %v1460 = vcombine.low %v1409, %v1425
        %v1462 = vunpack.c.l.s4 1983009808
        %v1463 = vunpack.c.0.s8 %v1462
        %v1464 = vlaneseq
        %v1465 = vshrl.u32 %v1464, 7
        %v1466 = vsub.s32 %v1463, %v1465
        %v1467 = vrot.slane %v1460, %v1466
        %v1468 = vcombine.low %v1417, %v1433
        %v1470 = vunpack.c.l.s4 1983009808
        %v1471 = vunpack.c.0.s8 %v1470
        %v1472 = vlaneseq
        %v1473 = vshrl.u32 %v1472, 7
        %v1474 = vsub.s32 %v1471, %v1473
        %v1475 = vrot.slane %v1468, %v1474
        %v1476 = vcombine.low %v1467, %v1475
        %v1478 = vunpack.c.l.s4 1934713408
        %v1479 = vunpack.c.0.s8 %v1478
        %v1480 = vlaneseq
        %v1481 = vshrl.u32 %v1480, 7
        %v1482 = vsub.s32 %v1479, %v1481
        %v1483 = vrot.slane %v1476, %v1482
        %v1484 = vcombine.high %v1483, 0
        %v1487 = vpack.i.b16 %v1483, %v1458
        %v1488 = vshrl.u32 %v1458, 16
        %v1489 = vshrl.u32 %v1483, 16
        %v1490 = vpack.i.b16 %v1489, %v1488
        %v1493 = vpack.i.b16 %v1484, %v1459
        %v1494 = vshrl.u32 %v1459, 16
        %v1495 = vshrl.u32 %v1484, 16
        %v1496 = vpack.i.b16 %v1495, %v1494
        %1497 = vrot.lane.b32.xlu0 %v1490, 8
        %v1498 = vpop.permute.xlu0 %1497
        %1499 = vrot.lane.b32.xlu0 %v1493, 16
        %v1500 = vpop.permute.xlu0 %1499
        %1501 = vrot.lane.b32.xlu0 %v1496, 24
        %v1502 = vpop.permute.xlu0 %1501
        %v1505 = vsel %vm917, %v1487, %v1498
        %vm1506 = vcmask 130048
        %v1508 = vsel %vm1506, %v1505, %v1500
        %vm1509 = vcmask 195584
        %v1511 = vsel %vm1509, %v1508, %v1502
        %v1512 = vld [vmem:[%s6] sm:$0xf]
        %v1513 = vld [vmem:[%s6 + $0x4] sm:$0xf]
        %v1514 = vld [vmem:[%s6 + $0x8] sm:$0xf]
        %v1515 = vld [vmem:[%s6 + $0xc] sm:$0xf]
        %v1516 = vld [vmem:[%s7] sm:$0x1]
        %v1518 = vlaneseq
        %v1519 = vshrl.u32 %v1518, 7
        %v1520 = vsub.s32 0, %v1519
        %v1521 = vrot.slane %v1516, %v1520
        %v1527 = vunpack.c.l.b16 %v1512
        %v1528 = vunpack.c.l.b16 %v1513
        %v1529 = vunpack.c.l.b16 %v1514
        %v1530 = vunpack.c.l.b16 %v1515
        %v1531 = vpack.c.b16 %v1528, %v1527
        %v1532 = vpack.c.b16 %v1530, %v1529
        %v1535 = vsel %vm467, %v1511, 0
        %1537 = vmatprep.subr.bf16.mxu0 0
        %1538 = vmatpush1.bf16.msra.mxu0 %v1531
        %1539 = vmatprep.subr.bf16.mxu0 0
        %1540 = vmatpush1.bf16.msra.mxu0 %v1532
        %1541 = vmatprep.subr.bf16.mxu0 0
        %1542 = vmatpush1.bf16.msra.mxu0 0
        %1543 = vmatprep.subr.bf16.mxu0 0
        %1544 = vmatpush1.bf16.msra.mxu0 0
        %1545 = vmatprep.subr.bf16.mxu0 0
        %1546 = vmatpush1.bf16.msra.mxu0 0
        %1547 = vmatprep.subr.bf16.mxu0 0
        %1548 = vmatpush1.bf16.msra.mxu0 0
        %1549 = vmatprep.subr.bf16.mxu0 0
        %1550 = vmatpush1.bf16.msra.mxu0 0
        %1551 = vmatprep.subr.bf16.mxu0 0
        %1552 = vmatpush1.bf16.msra.mxu0 0
        %1553 = vmatprep.subr.bf16.mxu0 0
        %1554 = vmatpush1.bf16.msra.mxu0 0
        %1555 = vmatprep.subr.bf16.mxu0 0
        %1556 = vmatpush1.bf16.msra.mxu0 0
        %1557 = vmatprep.subr.bf16.mxu0 0
        %1558 = vmatpush1.bf16.msra.mxu0 0
        %1559 = vmatprep.subr.bf16.mxu0 0
        %1560 = vmatpush1.bf16.msra.mxu0 0
        %1561 = vmatprep.subr.bf16.mxu0 0
        %1562 = vmatpush1.bf16.msra.mxu0 0
        %1563 = vmatprep.subr.bf16.mxu0 0
        %1564 = vmatpush1.bf16.msra.mxu0 0
        %1565 = vmatprep.subr.bf16.mxu0 0
        %1566 = vmatpush1.bf16.msra.mxu0 0
        %1567 = vmatprep.subr.bf16.mxu0 0
        %1568 = vmatpush1.bf16.msra.mxu0 0
        %1569 = vmatprep.mubr.bf16.mxu0 0
        %1570 = vmatmul.mubr.bf16.gmra.mrb[0].mxu0 %v1535
        %v1571 = vpop.f32.mrb[0].mxu0
        %v1572 = vadd.f32 %v1521, %v1571
        %v1573 = vpop.f32.mrb[0].mxu0
        %v1574 = vpop.f32.mrb[0].mxu0
        %v1575 = vpop.f32.mrb[0].mxu0
        %1576 = vdwg.mxu0
        %v1577 = vadd.f32 %v464, %v1572
        %v1578 = vld [vmem:[%s8] sm:$0x1]
        %v1579 = vld [vmem:[%s9] sm:$0x1]
        %v1580 = vsel %vm467, %v1577, 0.0
        %1581 = vadd.xlane.f32.xlu0 %v1580
        %v1582 = vpop.xlane.xlu0 %1581
        %v1583 = vmul.f32 %v1582, %v471
        %v1584 = vsub.f32 %v1577, %v1583
        %v1585 = vmul.f32 %v1584, %v1584
        %v1586 = vsel %vm467, %v1585, 0.0
        %1587 = vadd.xlane.f32.xlu0 %v1586
        %v1588 = vpop.xlane.xlu0 %1587
        %v1589 = vmul.f32 %v1588, %v471
        %v1590 = vadd.f32 %v1589, 1e-05
        %v1591 = vrsqrt.pop %v1590
        %v1592 = vmul.f32 %v1584, %v1591
        %v1594 = vlaneseq
        %v1595 = vshrl.u32 %v1594, 7
        %v1596 = vsub.s32 0, %v1595
        %v1597 = vrot.slane %v1578, %v1596
        %v1599 = vmul.f32 %v1592, %v1597
        %v1601 = vlaneseq
        %v1602 = vshrl.u32 %v1601, 7
        %v1603 = vsub.s32 0, %v1602
        %v1604 = vrot.slane %v1579, %v1603
        %v1606 = vadd.f32 %v1599, %v1604
        %v1607 = vpack.c.bf16 %v1606, %v1606
        %v1608 = vld [vmem:[%s10] sm:$0xf]
        %v1609 = vld [vmem:[%s10 + $0x4] sm:$0xf]
        %v1610 = vld [vmem:[%s10 + $0x8] sm:$0xf]
        %v1611 = vld [vmem:[%s10 + $0xc] sm:$0xf]
        %v1612 = vld [vmem:[%s11] sm:$0x1]
        %v1614 = vlaneseq
        %v1615 = vshrl.u32 %v1614, 7
        %v1616 = vsub.s32 0, %v1615
        %v1617 = vrot.slane %v1612, %v1616
        %v1623 = vunpack.c.l.b16 %v1608
        %v1624 = vunpack.c.l.b16 %v1609
        %v1625 = vunpack.c.l.b16 %v1610
        %v1626 = vunpack.c.l.b16 %v1611
        %v1627 = vpack.c.b16 %v1624, %v1623
        %v1628 = vpack.c.b16 %v1626, %v1625
        %v1632 = vsel %vm467, %v1607, 0
        %1634 = vmatprep.subr.bf16.mxu0 0
        %1635 = vmatpush1.bf16.msra.mxu0 %v1627
        %1636 = vmatprep.subr.bf16.mxu0 0
        %1637 = vmatpush1.bf16.msra.mxu0 %v1628
        %1638 = vmatprep.subr.bf16.mxu0 0
        %1639 = vmatpush1.bf16.msra.mxu0 0
        %1640 = vmatprep.subr.bf16.mxu0 0
        %1641 = vmatpush1.bf16.msra.mxu0 0
        %1642 = vmatprep.subr.bf16.mxu0 0
        %1643 = vmatpush1.bf16.msra.mxu0 0
        %1644 = vmatprep.subr.bf16.mxu0 0
        %1645 = vmatpush1.bf16.msra.mxu0 0
        %1646 = vmatprep.subr.bf16.mxu0 0
        %1647 = vmatpush1.bf16.msra.mxu0 0
        %1648 = vmatprep.subr.bf16.mxu0 0
        %1649 = vmatpush1.bf16.msra.mxu0 0
        %1650 = vmatprep.subr.bf16.mxu0 0
        %1651 = vmatpush1.bf16.msra.mxu0 0
        %1652 = vmatprep.subr.bf16.mxu0 0
        %1653 = vmatpush1.bf16.msra.mxu0 0
        %1654 = vmatprep.subr.bf16.mxu0 0
        %1655 = vmatpush1.bf16.msra.mxu0 0
        %1656 = vmatprep.subr.bf16.mxu0 0
        %1657 = vmatpush1.bf16.msra.mxu0 0
        %1658 = vmatprep.subr.bf16.mxu0 0
        %1659 = vmatpush1.bf16.msra.mxu0 0
        %1660 = vmatprep.subr.bf16.mxu0 0
        %1661 = vmatpush1.bf16.msra.mxu0 0
        %1662 = vmatprep.subr.bf16.mxu0 0
        %1663 = vmatpush1.bf16.msra.mxu0 0
        %1664 = vmatprep.subr.bf16.mxu0 0
        %1665 = vmatpush1.bf16.msra.mxu0 0
        %1666 = vmatprep.mubr.bf16.mxu0 0
        %1667 = vmatmul.mubr.bf16.gmra.mrb[0].mxu0 %v1632
        %v1668 = vpop.f32.mrb[0].mxu0
        %v1669 = vadd.f32 %v1617, %v1668
        %v1670 = vpop.f32.mrb[0].mxu0
        %v1671 = vpop.f32.mrb[0].mxu0
        %v1672 = vpop.f32.mrb[0].mxu0
        %1673 = vdwg.mxu0
        %v1674 = vmul.f32 %v1669, 0.5
        %v1675 = vmul.f32 %v1669, 0.70710677
        %v1676 = verf.f32.pop %v1675
        %v1677 = vadd.f32 %v1676, 1.0
        %v1678 = vmul.f32 %v1674, %v1677
        %v1679 = vpack.c.bf16 %v1678, %v1678
        %v1680 = vld [vmem:[%s12] sm:$0xf]
        %v1681 = vld [vmem:[%s12 + $0x4] sm:$0xf]
        %v1682 = vld [vmem:[%s12 + $0x8] sm:$0xf]
        %v1683 = vld [vmem:[%s12 + $0xc] sm:$0xf]
        %v1684 = vld [vmem:[%s12 + $0x10] sm:$0xf]
        %v1685 = vld [vmem:[%s12 + $0x14] sm:$0xf]
        %v1686 = vld [vmem:[%s12 + $0x18] sm:$0xf]
        %v1687 = vld [vmem:[%s12 + $0x1c] sm:$0xf]
        %v1688 = vld [vmem:[%s12 + $0x20] sm:$0xf]
        %v1689 = vld [vmem:[%s12 + $0x24] sm:$0xf]
        %v1690 = vld [vmem:[%s12 + $0x28] sm:$0xf]
        %v1691 = vld [vmem:[%s12 + $0x2c] sm:$0xf]
        %v1692 = vld [vmem:[%s12 + $0x30] sm:$0xf]
        %v1693 = vld [vmem:[%s12 + $0x34] sm:$0xf]
        %v1694 = vld [vmem:[%s12 + $0x38] sm:$0xf]
        %v1695 = vld [vmem:[%s12 + $0x3c] sm:$0xf]
        %v1696 = vld [vmem:[%s13] sm:$0x1]
        %v1698 = vlaneseq
        %v1699 = vshrl.u32 %v1698, 7
        %v1700 = vsub.s32 0, %v1699
        %v1701 = vrot.slane %v1696, %v1700
        %v1719 = vunpack.c.l.b16 %v1680
        %v1720 = vunpack.c.l.b16 %v1681
        %v1721 = vunpack.c.l.b16 %v1682
        %v1722 = vunpack.c.l.b16 %v1683
        %v1723 = vunpack.c.l.b16 %v1684
        %v1724 = vunpack.c.l.b16 %v1685
        %v1725 = vunpack.c.l.b16 %v1686
        %v1726 = vunpack.c.l.b16 %v1687
        %v1727 = vunpack.c.l.b16 %v1688
        %v1728 = vunpack.c.l.b16 %v1689
        %v1729 = vunpack.c.l.b16 %v1690
        %v1730 = vunpack.c.l.b16 %v1691
        %v1731 = vunpack.c.l.b16 %v1692
        %v1732 = vunpack.c.l.b16 %v1693
        %v1733 = vunpack.c.l.b16 %v1694
        %v1734 = vunpack.c.l.b16 %v1695
        %v1735 = vpack.c.b16 %v1720, %v1719
        %v1736 = vpack.c.b16 %v1722, %v1721
        %v1737 = vpack.c.b16 %v1724, %v1723
        %v1738 = vpack.c.b16 %v1726, %v1725
        %v1739 = vpack.c.b16 %v1728, %v1727
        %v1740 = vpack.c.b16 %v1730, %v1729
        %v1741 = vpack.c.b16 %v1732, %v1731
        %v1742 = vpack.c.b16 %v1734, %v1733
        %1751 = vmatprep.subr.bf16.mxu0 0
        %1752 = vmatpush1.bf16.msra.mxu0 %v1735
        %1753 = vmatprep.subr.bf16.mxu0 0
        %1754 = vmatpush1.bf16.msra.mxu0 %v1736
        %1755 = vmatprep.subr.bf16.mxu0 0
        %1756 = vmatpush1.bf16.msra.mxu0 %v1737
        %1757 = vmatprep.subr.bf16.mxu0 0
        %1758 = vmatpush1.bf16.msra.mxu0 %v1738
        %1759 = vmatprep.subr.bf16.mxu0 0
        %1760 = vmatpush1.bf16.msra.mxu0 %v1739
        %1761 = vmatprep.subr.bf16.mxu0 0
        %1762 = vmatpush1.bf16.msra.mxu0 %v1740
        %1763 = vmatprep.subr.bf16.mxu0 0
        %1764 = vmatpush1.bf16.msra.mxu0 %v1741
        %1765 = vmatprep.subr.bf16.mxu0 0
        %1766 = vmatpush1.bf16.msra.mxu0 %v1742
        %1767 = vmatprep.subr.bf16.mxu0 0
        %1768 = vmatpush1.bf16.msra.mxu0 0
        %1769 = vmatprep.subr.bf16.mxu0 0
        %1770 = vmatpush1.bf16.msra.mxu0 0
        %1771 = vmatprep.subr.bf16.mxu0 0
        %1772 = vmatpush1.bf16.msra.mxu0 0
        %1773 = vmatprep.subr.bf16.mxu0 0
        %1774 = vmatpush1.bf16.msra.mxu0 0
        %1775 = vmatprep.subr.bf16.mxu0 0
        %1776 = vmatpush1.bf16.msra.mxu0 0
        %1777 = vmatprep.subr.bf16.mxu0 0
        %1778 = vmatpush1.bf16.msra.mxu0 0
        %1779 = vmatprep.subr.bf16.mxu0 0
        %1780 = vmatpush1.bf16.msra.mxu0 0
        %1781 = vmatprep.subr.bf16.mxu0 0
        %1782 = vmatpush1.bf16.msra.mxu0 0
        %1783 = vmatprep.mubr.bf16.mxu0 0
        %1784 = vmatmul.mubr.bf16.gmra.mrb[0].mxu0 %v1679
        %v1785 = vpop.f32.mrb[0].mxu0
        %v1786 = vadd.f32 %v1701, %v1785
        %v1787 = vpop.f32.mrb[0].mxu0
        %v1788 = vpop.f32.mrb[0].mxu0
        %v1789 = vpop.f32.mrb[0].mxu0
        %1790 = vdwg.mxu0
        %v1791 = vadd.f32 %v1577, %v1786
        %1792 = vst.msk [vmem:[%s458] sm:$0xff] %vm467, %v1791
        %s1793 = sand.u32 %s335, 1
        %s1794 = scalar_lea.sflag [#allocation3], %s1793
        %s1795 = sand.u32 %s335, 1
        %s1796 = smul.addr %s1795, 8
        %s1797 = scalar_lea.vmem [#allocation2], %s1796
        // Predicated region
        $region77: #{tpu_custom_call.1} parent=75 // pred_check
          %p1798 = pneg %p345
        $region78: #{tpu_custom_call.1} parent=75 // pred_check_branch
          %1800 = sbr.rel (%p1798) target = $region80
        $region79: #{tpu_custom_call.1} parent=75 // pred_region
          %s1802 = ssub.s32 128, 128
          %1803 = vsyncadd %s1794, %s1802
          %s1804 = smul.addr %s28, 128
          %s1805 = scalar_lea.hbm %s14, %s1804
          %s1807 = sshll.u32 %s1797, 4
          %s1808 = int_to_ptr.vmem [resolvable:$true] %s1807
          %1810 = dma.vmem_to_hbm [thread:$0]  %s1808, 128, %s1805, %s1794
        $region80: #{tpu_custom_call.1} parent=75 // pred_fallthru
          _
      $region76: #{tpu_custom_call.1} parent=5 // pred_fallthru
        _
      %p1811 = scmp.le.s32.totalorder 2, %s23
      // Predicated region
      $region81: #{tpu_custom_call.1} parent=5 // pred_check
        %p1812 = pneg %p1811
      $region82: #{tpu_custom_call.1} parent=5 // pred_check_branch
        %1814 = sbr.rel (%p1812) target = $region84
      $region83: #{tpu_custom_call.1} parent=5 // pred_region
        %s1815 = ssub.s32 %s23, 2
        // Predicated region
        $region85: #{tpu_custom_call.1} parent=83 // pred_check
          %p1816 = pneg %p351
        $region86: #{tpu_custom_call.1} parent=83 // pred_check_branch
          %1818 = sbr.rel (%p1816) target = $region88
        $region87: #{tpu_custom_call.1} parent=83 // pred_region
          %s1819 = sand.u32 %s336, 1
          %s1820 = scalar_lea.sflag [#allocation3], %s1819
          %s1821 = sand.u32 %s336, 1
          %s1822 = smul.addr %s1821, 8
          %s1823 = scalar_lea.vmem [#allocation2], %s1822
          %1824 = dma.done %s1820, 128
        $region88: #{tpu_custom_call.1} parent=83 // pred_fallthru
          _
      $region84: #{tpu_custom_call.1} parent=5 // pred_fallthru
        _
    $region6: #{tpu_custom_call.1} parent=1 // loop_footer
      %s27 = sadd.s32 1, %s23
    $region7: #{tpu_custom_call.1} parent=1 // loop_footer_branch
      %22 = sbr.rel target = $region3
    $region8: #{tpu_custom_call.1} parent=1 // loop_exit
      _
    %1825 = vsyncpa [#allocation3], 1
    %s1826 = scalar_lea.sflag [#allocation3], 1
    %1827 = vsyncpa %s1826, 1

</llo_original>
